<compile_context>
chip_gen: v7x
topology: tpu7x:2x2x1
jax: 0.10.0
libtpu: 0.0.40
codegen_flags: <defaults>
</compile_context>

<pallas_src>
import numpy as np
import jax
import jax.numpy as jnp
from jax.experimental import pallas as pl
from jax.experimental.pallas import tpu as pltpu


# ----------------------------- Pallas kernel --------------------------------

def _mesh_ps_kernel(xr_ref, xi_ref, mr_ref, mi_ref, or_ref, oi_ref):
    """One batch tile through all L stages (atten + final PS pre-folded into M).

    xr_ref/xi_ref : (TB, nF_pad) f32 input state planes
    mr_ref/mi_ref : (L, nF_pad, nF_pad) stage-matrix planes (f32 or bf16), row-vector convention
    or_ref/oi_ref : (TB, nF_pad) f32 output planes
    """
    L = mr_ref.shape[0]
    cdt = mr_ref.dtype            # matmul feed dtype (f32 or bf16); accumulation stays f32

    xr = xr_ref[...]
    xi = xi_ref[...]

    # L is small and static -> fully unrolled loop over resident stage matrices.
    # (For large L, switch to lax.fori_loop with dynamic first-axis indexing mr_ref[l].)
    for l in range(L):
        Mr = mr_ref[l]            # (nF_pad, nF_pad)
        Mi = mi_ref[l]
        Ms = Mr + Mi              # VPU add; free next to the saturated MXU slot

        ar = xr.astype(cdt)
        ai = xi.astype(cdt)
        # Gauss 3-matmul complex product: real = t1 - t2, imag = t3 - t1 - t2.
        t1 = jnp.dot(ar, Mr, preferred_element_type=jnp.float32)
        t2 = jnp.dot(ai, Mi, preferred_element_type=jnp.float32)
        t3 = jnp.dot((xr + xi).astype(cdt), Ms, preferred_element_type=jnp.float32)
        xr = t1 - t2
        xi = t3 - t1 - t2

    or_ref[...] = xr
    oi_ref[...] = xi


def _round_up(x, m):
    return ((x + m - 1) // m) * m


def clements_mzi_ps_forward(x, M_folded, *, matrix_dtype=jnp.float32, batch_tile=128):
    """Run the mesh + output phase shifters.

    x        : (B, nF) complex64 input state
    M_folded : (L, nF, nF) complex64 per-stage transfer matrices with attenuation and the
               final phase shifter already folded in (row-vector convention: x_row @ M).
    Returns (B, nF) complex64.
    """
    B, nF = x.shape
    L = M_folded.shape[0]

    # Lane-dense padding: nF -> multiple of 128, batch -> multiple of 8 (and of the tile).
    nF_pad = _round_up(nF, 128)
    B_pad = _round_up(B, 8)
    TB = min(B_pad, batch_tile)
    B_pad = _round_up(B_pad, TB)

    # Identity-pad the stage matrices so padded (zero) lanes pass through untouched.
    Mp = jnp.broadcast_to(jnp.eye(nF_pad, dtype=jnp.complex64), (L, nF_pad, nF_pad))
    Mp = Mp.at[:, :nF, :nF].set(M_folded.astype(jnp.complex64))
    m_r = jnp.real(Mp).astype(matrix_dtype)
    m_i = jnp.imag(Mp).astype(matrix_dtype)

    xr = jnp.pad(jnp.real(x).astype(jnp.float32), ((0, B_pad - B), (0, nF_pad - nF)))
    xi = jnp.pad(jnp.imag(x).astype(jnp.float32), ((0, B_pad - B), (0, nF_pad - nF)))

    grid = (B_pad // TB,)
    x_spec = pl.BlockSpec((TB, nF_pad), lambda b: (b, 0))
    m_spec = pl.BlockSpec((L, nF_pad, nF_pad), lambda b: (0, 0, 0))   # resident, constant index

    m_itemsize = jnp.dtype(matrix_dtype).itemsize
    vmem_bytes = (4 * 2 * TB * nF_pad * 4                       # x / out planes, double-buffered
                  + 2 * 2 * L * nF_pad * nF_pad * m_itemsize)   # M planes (headroom for 2 bufs)
    # >= 32 MiB (raises v5e's 16 MiB default), capped at 64 MiB (v7x physical per-TC VMEM).
    vmem_limit = int(min(64 * 1024 * 1024, max(32 * 1024 * 1024, 2 * vmem_bytes)))

    out_r, out_i = pl.pallas_call(
        _mesh_ps_kernel,
        out_shape=(jax.ShapeDtypeStruct((B_pad, nF_pad), jnp.float32),
                   jax.ShapeDtypeStruct((B_pad, nF_pad), jnp.float32)),
        grid_spec=pltpu.PrefetchScalarGridSpec(
            num_scalar_prefetch=0,
            grid=grid,
            in_specs=[x_spec, x_spec, m_spec, m_spec],
            out_specs=[x_spec, x_spec],
        ),
        compiler_params=pltpu.CompilerParams(
            dimension_semantics=("parallel",),      # batch tiles -> both TCs on v7x
            vmem_limit_bytes=vmem_limit),
    )(xr, xi, m_r, m_i)

    return (out_r[:B, :nF] + 1j * out_i[:B, :nF]).astype(jnp.complex64)


# --------------------------- Parameter / index glue --------------------------

def _make_indexAB(nFeatures):
    """Clements even/odd pairings, padded with (-1,-1) to a common nAngles."""
    indexA = [[2 * k, 2 * k + 1] for k in range(nFeatures // 2)]
    indexB = [[2 * k + 1, 2 * k + 2] for k in range((nFeatures - 1) // 2)]
    nAngles = max(len(indexA), len(indexB))
    pad = lambda lst: lst + [[-1, -1]] * (nAngles - len(lst))
    return pad(indexA), pad(indexB)


def build_clements_index(nFeatures, nLayers):
    indexA, indexB = _make_indexAB(nFeatures)
    indexAB = ([indexA] * 2 + [indexB] * 2) * (nLayers // 2)
    if nLayers % 2 == 1:
        indexAB += [indexA] * 2
    return np.asarray(indexAB, dtype=np.int32)   # (2*nLayers, nAngles, 2)


def build_stage_matrices(nFeatures, index, params, split):
    """Per-stage complex transfer matrices, transposed for x_row @ M convention."""
    L = index.shape[0]
    mats = []
    for l in range(L):
        U = jnp.eye(nFeatures, dtype=jnp.complex64)
        for a in range(index.shape[1]):
            i, j = int(index[l, a, 0]), int(index[l, a, 1])
            if i < 0:
                continue
            th = params[l, a].astype(jnp.complex64)
            bs = (jnp.pi / 4 + split[l, a])
            c = jnp.cos(bs).astype(jnp.complex64)
            s = (1j * jnp.sin(bs)).astype(jnp.complex64)
            e = jnp.exp(1j * th)
            U = U.at[i, i].set(c * e)
            U = U.at[i, j].set(s)
            U = U.at[j, i].set(s * e)
            U = U.at[j, j].set(c)
        mats.append(U.T)                          # row-vector convention
    return jnp.stack(mats)                        # (L, nF, nF) complex64


def fold_atten_and_ps(M, atten, ps_params):
    """Fold per-stage attenuation and the final ModulePS phase shift into the stage matrices.

    (x * atten[l]) @ M[l] == x @ (diag(atten[l]) @ M[l])   -> row-scale M[l]
    x_final * exp(1j*ps)  == x_final @ diag(exp(1j*ps))    -> column-scale M[L-1]
    """
    M = M * atten[:, :, None].astype(jnp.complex64)
    ps = jnp.exp(1j * ps_params.astype(jnp.complex64))
    M = M.at[-1].set(M[-1] * ps[None, :])
    return M


def reference_forward(x, atten, M, ps_params):
    """Pure-JAX complex reference of the same forward (unfolded form)."""
    out = x
    for l in range(M.shape[0]):
        out = out * atten[l][None, :]
        out = out @ M[l]
    out = out * jnp.exp(1j * ps_params.astype(jnp.complex64))[None, :]
    return out


# ---------------------------------- main -------------------------------------

if __name__ == "__main__":
    nFeatures = 8
    nLayers = 4
    batch = 2

    key = jax.random.PRNGKey(0)
    k_params, k_split, k_amag, k_aph, k_ps, k_xr, k_xi = jax.random.split(key, 7)

    # Module parameters / buffers.  Non-trivial atten / split / ps values are used so the
    # host-side fold (atten + final PS into M) is actually exercised and validated.
    index = build_clements_index(nFeatures, nLayers)            # (L, nAngles, 2) int32
    L, nAngles, _ = index.shape
    clements_params = jax.random.normal(k_params, (L, nAngles), dtype=jnp.float32)
    split = 0.01 * jax.random.normal(k_split, (L, nAngles), dtype=jnp.float32)
    atten = ((1.0 - 0.05 * jax.random.uniform(k_amag, (L, nFeatures)))
             * jnp.exp(1j * 0.1 * jax.random.normal(k_aph, (L, nFeatures)))).astype(jnp.complex64)
    ps_params = (0.5 * jax.random.normal(k_ps, (nFeatures,))).astype(jnp.float32)

    # Complex input (batch, nFeatures).
    xr = jax.random.normal(k_xr, (batch, nFeatures), dtype=jnp.float32)
    xi = jax.random.normal(k_xi, (batch, nFeatures), dtype=jnp.float32)
    x = (xr + 1j * xi).astype(jnp.complex64)

    # Host-side parameter build: stage matrices with atten + final PS folded in.
    M = build_stage_matrices(nFeatures, index, clements_params, split)
    M_folded = fold_atten_and_ps(M, atten, ps_params)

    ref = reference_forward(x, atten, M, ps_params)

    # f32 matrix feeds: tight tolerance against the complex64 reference.
    out_f32 = jax.block_until_ready(
        clements_mzi_ps_forward(x, M_folded, matrix_dtype=jnp.float32))
    np.testing.assert_allclose(np.asarray(out_f32), np.asarray(ref), rtol=1e-4, atol=1e-4)

    # bf16 matrix feeds (f32 state + accumulation): looser tolerance for bf16 quantization
    # compounded over the 2*nLayers stages.
    out_bf16 = jax.block_until_ready(
        clements_mzi_ps_forward(x, M_folded, matrix_dtype=jnp.bfloat16))
    np.testing.assert_allclose(np.asarray(out_bf16), np.asarray(ref), rtol=1e-1, atol=1e-1)

    print("KERNEL_OK")
</pallas_src>

<mosaic_0001>
module attributes {stable_mosaic.version = 11 : i64} {
  func.func @_mesh_ps_kernel(%arg0: i32, %arg1: memref<8x128xf32, #tpu.memory_space<vmem>>, %arg2: memref<8x128xf32, #tpu.memory_space<vmem>>, %arg3: memref<8x128x128xf32, #tpu.memory_space<vmem>>, %arg4: memref<8x128x128xf32, #tpu.memory_space<vmem>>, %arg5: memref<8x128xf32, #tpu.memory_space<vmem>>, %arg6: memref<8x128xf32, #tpu.memory_space<vmem>>) attributes {dimension_semantics = [#tpu.dimension_semantics<parallel>], iteration_bounds = array<i64: 1>, scalar_prefetch = 0 : i64, scratch_operands = 0 : i64, tpu.core_type = #tpu.core_type<tc>, window_params = [{transform_indices = @transform_0, window_bounds = array<i64: 8, 128>}, {transform_indices = @transform_1, window_bounds = array<i64: 8, 128>}, {pipeline_mode = #tpu.pipeline_mode<synchronous>, transform_indices = @transform_2, window_bounds = array<i64: 8, 128, 128>}, {pipeline_mode = #tpu.pipeline_mode<synchronous>, transform_indices = @transform_3, window_bounds = array<i64: 8, 128, 128>}, {transform_indices = @transform_4, window_bounds = array<i64: 8, 128>}, {transform_indices = @transform_5, window_bounds = array<i64: 8, 128>}]} {
    %c0 = arith.constant 0 : index
    %c0_0 = arith.constant 0 : index
    %0 = vector.load %arg1[%c0, %c0_0] : memref<8x128xf32, #tpu.memory_space<vmem>>, vector<8x128xf32>
    %c0_1 = arith.constant 0 : index
    %c0_2 = arith.constant 0 : index
    %1 = vector.load %arg2[%c0_1, %c0_2] : memref<8x128xf32, #tpu.memory_space<vmem>>, vector<8x128xf32>
    %c0_3 = arith.constant 0 : index
    %c0_4 = arith.constant 0 : index
    %c0_5 = arith.constant 0 : index
    %2 = vector.load %arg3[%c0_3, %c0_4, %c0_5] : memref<8x128x128xf32, #tpu.memory_space<vmem>>, vector<1x128x128xf32>
    %3 = vector.shape_cast %2 : vector<1x128x128xf32> to vector<128x128xf32>
    %c0_6 = arith.constant 0 : index
    %c0_7 = arith.constant 0 : index
    %c0_8 = arith.constant 0 : index
    %4 = vector.load %arg4[%c0_6, %c0_7, %c0_8] : memref<8x128x128xf32, #tpu.memory_space<vmem>>, vector<1x128x128xf32>
    %5 = vector.shape_cast %4 : vector<1x128x128xf32> to vector<128x128xf32>
    %6 = arith.addf %3, %5 : vector<128x128xf32>
    %cst = arith.constant dense<0.000000e+00> : vector<8x128xf32>
    %7 = tpu.matmul %0, %3, %cst {dimension_numbers = #tpu.dot_dimension_numbers<[1], [0], [0], [1], [0, 0, 1, 1], [], []>} : vector<8x128xf32>, vector<128x128xf32>, vector<8x128xf32> -> vector<8x128xf32>
    %cst_9 = arith.constant dense<0.000000e+00> : vector<8x128xf32>
    %8 = tpu.matmul %1, %5, %cst_9 {dimension_numbers = #tpu.dot_dimension_numbers<[1], [0], [0], [1], [0, 0, 1, 1], [], []>} : vector<8x128xf32>, vector<128x128xf32>, vector<8x128xf32> -> vector<8x128xf32>
    %9 = arith.addf %0, %1 : vector<8x128xf32>
    %cst_10 = arith.constant dense<0.000000e+00> : vector<8x128xf32>
    %10 = tpu.matmul %9, %6, %cst_10 {dimension_numbers = #tpu.dot_dimension_numbers<[1], [0], [0], [1], [0, 0, 1, 1], [], []>} : vector<8x128xf32>, vector<128x128xf32>, vector<8x128xf32> -> vector<8x128xf32>
    %11 = arith.subf %7, %8 : vector<8x128xf32>
    %12 = arith.subf %10, %7 : vector<8x128xf32>
    %13 = arith.subf %12, %8 : vector<8x128xf32>
    %c1 = arith.constant 1 : index
    %c0_11 = arith.constant 0 : index
    %c0_12 = arith.constant 0 : index
    %14 = vector.load %arg3[%c1, %c0_11, %c0_12] : memref<8x128x128xf32, #tpu.memory_space<vmem>>, vector<1x128x128xf32>
    %15 = vector.shape_cast %14 : vector<1x128x128xf32> to vector<128x128xf32>
    %c1_13 = arith.constant 1 : index
    %c0_14 = arith.constant 0 : index
    %c0_15 = arith.constant 0 : index
    %16 = vector.load %arg4[%c1_13, %c0_14, %c0_15] : memref<8x128x128xf32, #tpu.memory_space<vmem>>, vector<1x128x128xf32>
    %17 = vector.shape_cast %16 : vector<1x128x128xf32> to vector<128x128xf32>
    %18 = arith.addf %15, %17 : vector<128x128xf32>
    %cst_16 = arith.constant dense<0.000000e+00> : vector<8x128xf32>
    %19 = tpu.matmul %11, %15, %cst_16 {dimension_numbers = #tpu.dot_dimension_numbers<[1], [0], [0], [1], [0, 0, 1, 1], [], []>} : vector<8x128xf32>, vector<128x128xf32>, vector<8x128xf32> -> vector<8x128xf32>
    %cst_17 = arith.constant dense<0.000000e+00> : vector<8x128xf32>
    %20 = tpu.matmul %13, %17, %cst_17 {dimension_numbers = #tpu.dot_dimension_numbers<[1], [0], [0], [1], [0, 0, 1, 1], [], []>} : vector<8x128xf32>, vector<128x128xf32>, vector<8x128xf32> -> vector<8x128xf32>
    %21 = arith.addf %11, %13 : vector<8x128xf32>
    %cst_18 = arith.constant dense<0.000000e+00> : vector<8x128xf32>
    %22 = tpu.matmul %21, %18, %cst_18 {dimension_numbers = #tpu.dot_dimension_numbers<[1], [0], [0], [1], [0, 0, 1, 1], [], []>} : vector<8x128xf32>, vector<128x128xf32>, vector<8x128xf32> -> vector<8x128xf32>
    %23 = arith.subf %19, %20 : vector<8x128xf32>
    %24 = arith.subf %22, %19 : vector<8x128xf32>
    %25 = arith.subf %24, %20 : vector<8x128xf32>
    %c2 = arith.constant 2 : index
    %c0_19 = arith.constant 0 : index
    %c0_20 = arith.constant 0 : index
    %26 = vector.load %arg3[%c2, %c0_19, %c0_20] : memref<8x128x128xf32, #tpu.memory_space<vmem>>, vector<1x128x128xf32>
    %27 = vector.shape_cast %26 : vector<1x128x128xf32> to vector<128x128xf32>
    %c2_21 = arith.constant 2 : index
    %c0_22 = arith.constant 0 : index
    %c0_23 = arith.constant 0 : index
    %28 = vector.load %arg4[%c2_21, %c0_22, %c0_23] : memref<8x128x128xf32, #tpu.memory_space<vmem>>, vector<1x128x128xf32>
    %29 = vector.shape_cast %28 : vector<1x128x128xf32> to vector<128x128xf32>
    %30 = arith.addf %27, %29 : vector<128x128xf32>
    %cst_24 = arith.constant dense<0.000000e+00> : vector<8x128xf32>
    %31 = tpu.matmul %23, %27, %cst_24 {dimension_numbers = #tpu.dot_dimension_numbers<[1], [0], [0], [1], [0, 0, 1, 1], [], []>} : vector<8x128xf32>, vector<128x128xf32>, vector<8x128xf32> -> vector<8x128xf32>
    %cst_25 = arith.constant dense<0.000000e+00> : vector<8x128xf32>
    %32 = tpu.matmul %25, %29, %cst_25 {dimension_numbers = #tpu.dot_dimension_numbers<[1], [0], [0], [1], [0, 0, 1, 1], [], []>} : vector<8x128xf32>, vector<128x128xf32>, vector<8x128xf32> -> vector<8x128xf32>
    %33 = arith.addf %23, %25 : vector<8x128xf32>
    %cst_26 = arith.constant dense<0.000000e+00> : vector<8x128xf32>
    %34 = tpu.matmul %33, %30, %cst_26 {dimension_numbers = #tpu.dot_dimension_numbers<[1], [0], [0], [1], [0, 0, 1, 1], [], []>} : vector<8x128xf32>, vector<128x128xf32>, vector<8x128xf32> -> vector<8x128xf32>
    %35 = arith.subf %31, %32 : vector<8x128xf32>
    %36 = arith.subf %34, %31 : vector<8x128xf32>
    %37 = arith.subf %36, %32 : vector<8x128xf32>
    %c3 = arith.constant 3 : index
    %c0_27 = arith.constant 0 : index
    %c0_28 = arith.constant 0 : index
    %38 = vector.load %arg3[%c3, %c0_27, %c0_28] : memref<8x128x128xf32, #tpu.memory_space<vmem>>, vector<1x128x128xf32>
    %39 = vector.shape_cast %38 : vector<1x128x128xf32> to vector<128x128xf32>
    %c3_29 = arith.constant 3 : index
    %c0_30 = arith.constant 0 : index
    %c0_31 = arith.constant 0 : index
    %40 = vector.load %arg4[%c3_29, %c0_30, %c0_31] : memref<8x128x128xf32, #tpu.memory_space<vmem>>, vector<1x128x128xf32>
    %41 = vector.shape_cast %40 : vector<1x128x128xf32> to vector<128x128xf32>
    %42 = arith.addf %39, %41 : vector<128x128xf32>
    %cst_32 = arith.constant dense<0.000000e+00> : vector<8x128xf32>
    %43 = tpu.matmul %35, %39, %cst_32 {dimension_numbers = #tpu.dot_dimension_numbers<[1], [0], [0], [1], [0, 0, 1, 1], [], []>} : vector<8x128xf32>, vector<128x128xf32>, vector<8x128xf32> -> vector<8x128xf32>
    %cst_33 = arith.constant dense<0.000000e+00> : vector<8x128xf32>
    %44 = tpu.matmul %37, %41, %cst_33 {dimension_numbers = #tpu.dot_dimension_numbers<[1], [0], [0], [1], [0, 0, 1, 1], [], []>} : vector<8x128xf32>, vector<128x128xf32>, vector<8x128xf32> -> vector<8x128xf32>
    %45 = arith.addf %35, %37 : vector<8x128xf32>
    %cst_34 = arith.constant dense<0.000000e+00> : vector<8x128xf32>
    %46 = tpu.matmul %45, %42, %cst_34 {dimension_numbers = #tpu.dot_dimension_numbers<[1], [0], [0], [1], [0, 0, 1, 1], [], []>} : vector<8x128xf32>, vector<128x128xf32>, vector<8x128xf32> -> vector<8x128xf32>
    %47 = arith.subf %43, %44 : vector<8x128xf32>
    %48 = arith.subf %46, %43 : vector<8x128xf32>
    %49 = arith.subf %48, %44 : vector<8x128xf32>
    %c4 = arith.constant 4 : index
    %c0_35 = arith.constant 0 : index
    %c0_36 = arith.constant 0 : index
    %50 = vector.load %arg3[%c4, %c0_35, %c0_36] : memref<8x128x128xf32, #tpu.memory_space<vmem>>, vector<1x128x128xf32>
    %51 = vector.shape_cast %50 : vector<1x128x128xf32> to vector<128x128xf32>
    %c4_37 = arith.constant 4 : index
    %c0_38 = arith.constant 0 : index
    %c0_39 = arith.constant 0 : index
    %52 = vector.load %arg4[%c4_37, %c0_38, %c0_39] : memref<8x128x128xf32, #tpu.memory_space<vmem>>, vector<1x128x128xf32>
    %53 = vector.shape_cast %52 : vector<1x128x128xf32> to vector<128x128xf32>
    %54 = arith.addf %51, %53 : vector<128x128xf32>
    %cst_40 = arith.constant dense<0.000000e+00> : vector<8x128xf32>
    %55 = tpu.matmul %47, %51, %cst_40 {dimension_numbers = #tpu.dot_dimension_numbers<[1], [0], [0], [1], [0, 0, 1, 1], [], []>} : vector<8x128xf32>, vector<128x128xf32>, vector<8x128xf32> -> vector<8x128xf32>
    %cst_41 = arith.constant dense<0.000000e+00> : vector<8x128xf32>
    %56 = tpu.matmul %49, %53, %cst_41 {dimension_numbers = #tpu.dot_dimension_numbers<[1], [0], [0], [1], [0, 0, 1, 1], [], []>} : vector<8x128xf32>, vector<128x128xf32>, vector<8x128xf32> -> vector<8x128xf32>
    %57 = arith.addf %47, %49 : vector<8x128xf32>
    %cst_42 = arith.constant dense<0.000000e+00> : vector<8x128xf32>
    %58 = tpu.matmul %57, %54, %cst_42 {dimension_numbers = #tpu.dot_dimension_numbers<[1], [0], [0], [1], [0, 0, 1, 1], [], []>} : vector<8x128xf32>, vector<128x128xf32>, vector<8x128xf32> -> vector<8x128xf32>
    %59 = arith.subf %55, %56 : vector<8x128xf32>
    %60 = arith.subf %58, %55 : vector<8x128xf32>
    %61 = arith.subf %60, %56 : vector<8x128xf32>
    %c5 = arith.constant 5 : index
    %c0_43 = arith.constant 0 : index
    %c0_44 = arith.constant 0 : index
    %62 = vector.load %arg3[%c5, %c0_43, %c0_44] : memref<8x128x128xf32, #tpu.memory_space<vmem>>, vector<1x128x128xf32>
    %63 = vector.shape_cast %62 : vector<1x128x128xf32> to vector<128x128xf32>
    %c5_45 = arith.constant 5 : index
    %c0_46 = arith.constant 0 : index
    %c0_47 = arith.constant 0 : index
    %64 = vector.load %arg4[%c5_45, %c0_46, %c0_47] : memref<8x128x128xf32, #tpu.memory_space<vmem>>, vector<1x128x128xf32>
    %65 = vector.shape_cast %64 : vector<1x128x128xf32> to vector<128x128xf32>
    %66 = arith.addf %63, %65 : vector<128x128xf32>
    %cst_48 = arith.constant dense<0.000000e+00> : vector<8x128xf32>
    %67 = tpu.matmul %59, %63, %cst_48 {dimension_numbers = #tpu.dot_dimension_numbers<[1], [0], [0], [1], [0, 0, 1, 1], [], []>} : vector<8x128xf32>, vector<128x128xf32>, vector<8x128xf32> -> vector<8x128xf32>
    %cst_49 = arith.constant dense<0.000000e+00> : vector<8x128xf32>
    %68 = tpu.matmul %61, %65, %cst_49 {dimension_numbers = #tpu.dot_dimension_numbers<[1], [0], [0], [1], [0, 0, 1, 1], [], []>} : vector<8x128xf32>, vector<128x128xf32>, vector<8x128xf32> -> vector<8x128xf32>
    %69 = arith.addf %59, %61 : vector<8x128xf32>
    %cst_50 = arith.constant dense<0.000000e+00> : vector<8x128xf32>
    %70 = tpu.matmul %69, %66, %cst_50 {dimension_numbers = #tpu.dot_dimension_numbers<[1], [0], [0], [1], [0, 0, 1, 1], [], []>} : vector<8x128xf32>, vector<128x128xf32>, vector<8x128xf32> -> vector<8x128xf32>
    %71 = arith.subf %67, %68 : vector<8x128xf32>
    %72 = arith.subf %70, %67 : vector<8x128xf32>
    %73 = arith.subf %72, %68 : vector<8x128xf32>
    %c6 = arith.constant 6 : index
    %c0_51 = arith.constant 0 : index
    %c0_52 = arith.constant 0 : index
    %74 = vector.load %arg3[%c6, %c0_51, %c0_52] : memref<8x128x128xf32, #tpu.memory_space<vmem>>, vector<1x128x128xf32>
    %75 = vector.shape_cast %74 : vector<1x128x128xf32> to vector<128x128xf32>
    %c6_53 = arith.constant 6 : index
    %c0_54 = arith.constant 0 : index
    %c0_55 = arith.constant 0 : index
    %76 = vector.load %arg4[%c6_53, %c0_54, %c0_55] : memref<8x128x128xf32, #tpu.memory_space<vmem>>, vector<1x128x128xf32>
    %77 = vector.shape_cast %76 : vector<1x128x128xf32> to vector<128x128xf32>
    %78 = arith.addf %75, %77 : vector<128x128xf32>
    %cst_56 = arith.constant dense<0.000000e+00> : vector<8x128xf32>
    %79 = tpu.matmul %71, %75, %cst_56 {dimension_numbers = #tpu.dot_dimension_numbers<[1], [0], [0], [1], [0, 0, 1, 1], [], []>} : vector<8x128xf32>, vector<128x128xf32>, vector<8x128xf32> -> vector<8x128xf32>
    %cst_57 = arith.constant dense<0.000000e+00> : vector<8x128xf32>
    %80 = tpu.matmul %73, %77, %cst_57 {dimension_numbers = #tpu.dot_dimension_numbers<[1], [0], [0], [1], [0, 0, 1, 1], [], []>} : vector<8x128xf32>, vector<128x128xf32>, vector<8x128xf32> -> vector<8x128xf32>
    %81 = arith.addf %71, %73 : vector<8x128xf32>
    %cst_58 = arith.constant dense<0.000000e+00> : vector<8x128xf32>
    %82 = tpu.matmul %81, %78, %cst_58 {dimension_numbers = #tpu.dot_dimension_numbers<[1], [0], [0], [1], [0, 0, 1, 1], [], []>} : vector<8x128xf32>, vector<128x128xf32>, vector<8x128xf32> -> vector<8x128xf32>
    %83 = arith.subf %79, %80 : vector<8x128xf32>
    %84 = arith.subf %82, %79 : vector<8x128xf32>
    %85 = arith.subf %84, %80 : vector<8x128xf32>
    %c7 = arith.constant 7 : index
    %c0_59 = arith.constant 0 : index
    %c0_60 = arith.constant 0 : index
    %86 = vector.load %arg3[%c7, %c0_59, %c0_60] : memref<8x128x128xf32, #tpu.memory_space<vmem>>, vector<1x128x128xf32>
    %87 = vector.shape_cast %86 : vector<1x128x128xf32> to vector<128x128xf32>
    %c7_61 = arith.constant 7 : index
    %c0_62 = arith.constant 0 : index
    %c0_63 = arith.constant 0 : index
    %88 = vector.load %arg4[%c7_61, %c0_62, %c0_63] : memref<8x128x128xf32, #tpu.memory_space<vmem>>, vector<1x128x128xf32>
    %89 = vector.shape_cast %88 : vector<1x128x128xf32> to vector<128x128xf32>
    %90 = arith.addf %87, %89 : vector<128x128xf32>
    %cst_64 = arith.constant dense<0.000000e+00> : vector<8x128xf32>
    %91 = tpu.matmul %83, %87, %cst_64 {dimension_numbers = #tpu.dot_dimension_numbers<[1], [0], [0], [1], [0, 0, 1, 1], [], []>} : vector<8x128xf32>, vector<128x128xf32>, vector<8x128xf32> -> vector<8x128xf32>
    %cst_65 = arith.constant dense<0.000000e+00> : vector<8x128xf32>
    %92 = tpu.matmul %85, %89, %cst_65 {dimension_numbers = #tpu.dot_dimension_numbers<[1], [0], [0], [1], [0, 0, 1, 1], [], []>} : vector<8x128xf32>, vector<128x128xf32>, vector<8x128xf32> -> vector<8x128xf32>
    %93 = arith.addf %83, %85 : vector<8x128xf32>
    %cst_66 = arith.constant dense<0.000000e+00> : vector<8x128xf32>
    %94 = tpu.matmul %93, %90, %cst_66 {dimension_numbers = #tpu.dot_dimension_numbers<[1], [0], [0], [1], [0, 0, 1, 1], [], []>} : vector<8x128xf32>, vector<128x128xf32>, vector<8x128xf32> -> vector<8x128xf32>
    %95 = arith.subf %91, %92 : vector<8x128xf32>
    %96 = arith.subf %94, %91 : vector<8x128xf32>
    %97 = arith.subf %96, %92 : vector<8x128xf32>
    %c0_67 = arith.constant 0 : index
    %c0_68 = arith.constant 0 : index
    %98 = vector.load %arg5[%c0_67, %c0_68] : memref<8x128xf32, #tpu.memory_space<vmem>>, vector<8x128xf32>
    tpu.vector_store %arg5[%c0_67, %c0_68], %95 {strides = array<i32>} : memref<8x128xf32, #tpu.memory_space<vmem>>, vector<8x128xf32>,
    %c0_69 = arith.constant 0 : index
    %c0_70 = arith.constant 0 : index
    %99 = vector.load %arg6[%c0_69, %c0_70] : memref<8x128xf32, #tpu.memory_space<vmem>>, vector<8x128xf32>
    tpu.vector_store %arg6[%c0_69, %c0_70], %97 {strides = array<i32>} : memref<8x128xf32, #tpu.memory_space<vmem>>, vector<8x128xf32>,
    return
  }
  func.func @transform_0(%arg0: i32) -> (i32, i32) {
    %c0_i32 = arith.constant 0 : i32
    %c0_i32_0 = arith.constant 0 : i32
    return %arg0, %c0_i32 : i32, i32
  }
  func.func @transform_1(%arg0: i32) -> (i32, i32) {
    %c0_i32 = arith.constant 0 : i32
    %c0_i32_0 = arith.constant 0 : i32
    return %arg0, %c0_i32 : i32, i32
  }
  func.func @transform_2(%arg0: i32) -> (i32, i32, i32) {
    %c0_i32 = arith.constant 0 : i32
    %c0_i32_0 = arith.constant 0 : i32
    %c0_i32_1 = arith.constant 0 : i32
    %c0_i32_2 = arith.constant 0 : i32
    return %c0_i32, %c0_i32_0, %c0_i32_1 : i32, i32, i32
  }
  func.func @transform_3(%arg0: i32) -> (i32, i32, i32) {
    %c0_i32 = arith.constant 0 : i32
    %c0_i32_0 = arith.constant 0 : i32
    %c0_i32_1 = arith.constant 0 : i32
    %c0_i32_2 = arith.constant 0 : i32
    return %c0_i32, %c0_i32_0, %c0_i32_1 : i32, i32, i32
  }
  func.func @transform_4(%arg0: i32) -> (i32, i32) {
    %c0_i32 = arith.constant 0 : i32
    %c0_i32_0 = arith.constant 0 : i32
    return %arg0, %c0_i32 : i32, i32
  }
  func.func @transform_5(%arg0: i32) -> (i32, i32) {
    %c0_i32 = arith.constant 0 : i32
    %c0_i32_0 = arith.constant 0 : i32
    return %arg0, %c0_i32 : i32, i32
  }
}

</mosaic_0001>

<llo_original>
// kernel: tpu_custom_call.1
$region0: #{tpu_custom_call.1}
  #allocation0 [shape = 'u32[]', space=smem, size = 0x4, offset = 0x4, fixed_abs, tag = 'smem constant byte address 0x4 - core index']
  #allocation1 [shape = 'u32[144,128]{1,0:T(1,128)}', space=vmem, size = 0x12000, scoped, tag = 'internal scratch']
  %s0 = inlined_call_operand.hbm [shape: f32[8,128], index: 0, kind: input, shape index: {}]
  %s1 = inlined_call_operand.hbm [shape: f32[8,128], index: 1, kind: input, shape index: {}]
  %s2 = inlined_call_operand.hbm [shape: f32[8,128,128], index: 2, kind: input, shape index: {}]
  %s3 = inlined_call_operand.hbm [shape: f32[8,128,128], index: 3, kind: input, shape index: {}]
  %s4 = inlined_call_operand.hbm [shape: f32[8,128], index: 4, kind: output, shape index: {0}]
  %s5 = inlined_call_operand.hbm [shape: f32[8,128], index: 5, kind: output, shape index: {1}]
  %6 = xla_tuple %s4, %s5
  %s7 = sld [smem:[#allocation0]]
  $region50: #{tpu_custom_call.1} parent=0
    _
  %s9 = ssub.s32 1, %s7
  %s10 = scalar_select 0, %s9, %s7
  $region1: #{tpu_custom_call.1} parent=0
    #allocation2 [shape = 'u8[4096]{0}', space=vmem, size = 0x1000, scoped, tag = 'input window, operand 0, single buffered']
    #allocation3 [shape = 's32[1]{0}', space=sflag, size = 0x4, scoped, tag = 'scoped memory for tpu_custom_call.1']
    #allocation4 [shape = 's32[1]{0}', space=sflag, size = 0x4, scoped, tag = 'scoped memory for tpu_custom_call.1']
    #allocation5 [shape = 'u8[4096]{0}', space=vmem, size = 0x1000, scoped, tag = 'input window, operand 1, single buffered']
    #allocation6 [shape = 's32[1]{0}', space=sflag, size = 0x4, scoped, tag = 'scoped memory for tpu_custom_call.1']
    #allocation7 [shape = 'u8[524288]{0}', space=vmem, size = 0x80000, scoped, tag = 'input window, operand 2, single buffered']
    #allocation8 [shape = 'u8[524288]{0}', space=vmem, size = 0x80000, scoped, tag = 'input window, operand 3, single buffered']
    #allocation9 [shape = 's32[1]{0}', space=sflag, size = 0x4, scoped, tag = 'scoped memory for tpu_custom_call.1']
    #allocation10 [shape = 'u8[4096]{0}', space=vmem, size = 0x1000, scoped, tag = 'output window, operand 0, single buffered']
    #allocation11 [shape = 'u8[4096]{0}', space=vmem, size = 0x1000, scoped, tag = 'output window, operand 1, single buffered']
    #allocation12 [shape = 's32[1]{0}', space=sflag, size = 0x4, scoped, tag = 'scoped memory for tpu_custom_call.1']
    %11 = vsyncpa [#allocation3], 0
    %12 = vsyncpa [#allocation6], 0
    %13 = vsyncpa [#allocation9], 0
    %14 = vsyncpa [#allocation4], 0
    %15 = vsyncpa [#allocation12], 0
    // Predicated region
    $region2: #{tpu_custom_call.1} parent=1 // pred_check
      _
    $region3: #{tpu_custom_call.1} parent=1 // pred_check_branch
      %17 = sbr.rel (0) target = $region5
    $region4: #{tpu_custom_call.1} parent=1 // pred_region
      %s19 = ssub.s32 128, 128
      %20 = vsyncadd [#allocation3], %s19
      %s22 = sshll.u32 [#allocation2], 4
      %s23 = int_to_ptr.vmem [resolvable:$true] %s22
      %25 = dma.hbm_to_vmem [thread:$0]  %s0, 128, %s23, [#allocation3]
    $region5: #{tpu_custom_call.1} parent=1 // pred_fallthru
      _
    // Predicated region
    $region6: #{tpu_custom_call.1} parent=1 // pred_check
      _
    $region7: #{tpu_custom_call.1} parent=1 // pred_check_branch
      %27 = sbr.rel (0) target = $region9
    $region8: #{tpu_custom_call.1} parent=1 // pred_region
      %s29 = ssub.s32 128, 128
      %30 = vsyncadd [#allocation6], %s29
      %s32 = sshll.u32 [#allocation5], 4
      %s33 = int_to_ptr.vmem [resolvable:$true] %s32
      %35 = dma.hbm_to_vmem [thread:$0]  %s1, 128, %s33, [#allocation6]
    $region9: #{tpu_custom_call.1} parent=1 // pred_fallthru
      _
    // Predicated region
    $region10: #{tpu_custom_call.1} parent=1 // pred_check
      _
    $region11: #{tpu_custom_call.1} parent=1 // pred_check_branch
      %37 = sbr.rel (0) target = $region13
    $region12: #{tpu_custom_call.1} parent=1 // pred_region
      %s39 = ssub.s32 16384, 16384
      %40 = vsyncadd [#allocation6], %s39
      %s41 = sshll.u32 [#allocation7], 4
      %s42 = int_to_ptr.vmem [resolvable:$true] %s41
      %47 = dma.hbm_to_vmem [thread:$0]  %s2, 16384, %s42, [#allocation6], 128, 128, 8
    $region13: #{tpu_custom_call.1} parent=1 // pred_fallthru
      _
    // Predicated region
    $region14: #{tpu_custom_call.1} parent=1 // pred_check
      _
    $region15: #{tpu_custom_call.1} parent=1 // pred_check_branch
      %49 = sbr.rel (0) target = $region17
    $region16: #{tpu_custom_call.1} parent=1 // pred_region
      %s51 = ssub.s32 16384, 16384
      %52 = vsyncadd [#allocation9], %s51
      %s53 = sshll.u32 [#allocation8], 4
      %s54 = int_to_ptr.vmem [resolvable:$true] %s53
      %59 = dma.hbm_to_vmem [thread:$0]  %s3, 16384, %s54, [#allocation9], 128, 128, 8
    $region17: #{tpu_custom_call.1} parent=1 // pred_fallthru
      _
    // Predicated region
    $region18: #{tpu_custom_call.1} parent=1 // pred_check
      _
    $region19: #{tpu_custom_call.1} parent=1 // pred_check_branch
      %61 = sbr.rel (0) target = $region21
    $region20: #{tpu_custom_call.1} parent=1 // pred_region
      %62 = dma.done [#allocation3], 128
    $region21: #{tpu_custom_call.1} parent=1 // pred_fallthru
      _
    // Predicated region
    $region22: #{tpu_custom_call.1} parent=1 // pred_check
      _
    $region23: #{tpu_custom_call.1} parent=1 // pred_check_branch
      %64 = sbr.rel (0) target = $region25
    $region24: #{tpu_custom_call.1} parent=1 // pred_region
      %65 = dma.done [#allocation6], 128
    $region25: #{tpu_custom_call.1} parent=1 // pred_fallthru
      _
    // Predicated region
    $region26: #{tpu_custom_call.1} parent=1 // pred_check
      _
    $region27: #{tpu_custom_call.1} parent=1 // pred_check_branch
      %67 = sbr.rel (0) target = $region29
    $region28: #{tpu_custom_call.1} parent=1 // pred_region
      %68 = dma.done [#allocation6], 16384
    $region29: #{tpu_custom_call.1} parent=1 // pred_fallthru
      _
    // Predicated region
    $region30: #{tpu_custom_call.1} parent=1 // pred_check
      _
    $region31: #{tpu_custom_call.1} parent=1 // pred_check_branch
      %70 = sbr.rel (0) target = $region33
    $region32: #{tpu_custom_call.1} parent=1 // pred_region
      %71 = dma.done [#allocation9], 16384
    $region33: #{tpu_custom_call.1} parent=1 // pred_fallthru
      _
    %v72 = vld [vmem:[#allocation2] sm:$0xff]
    %v73 = vld [vmem:[#allocation5] sm:$0xff]
    %v74 = vld [vmem:[#allocation7] sm:$0xff]
    %v75 = vld [vmem:[#allocation7 + $0x8] sm:$0xff]
    %v76 = vld [vmem:[#allocation7 + $0x10] sm:$0xff]
    %v77 = vld [vmem:[#allocation7 + $0x18] sm:$0xff]
    %v78 = vld [vmem:[#allocation7 + $0x20] sm:$0xff]
    %v79 = vld [vmem:[#allocation7 + $0x28] sm:$0xff]
    %v80 = vld [vmem:[#allocation7 + $0x30] sm:$0xff]
    %v81 = vld [vmem:[#allocation7 + $0x38] sm:$0xff]
    %v82 = vld [vmem:[#allocation7 + $0x40] sm:$0xff]
    %v83 = vld [vmem:[#allocation7 + $0x48] sm:$0xff]
    %v84 = vld [vmem:[#allocation7 + $0x50] sm:$0xff]
    %v85 = vld [vmem:[#allocation7 + $0x58] sm:$0xff]
    %v86 = vld [vmem:[#allocation7 + $0x60] sm:$0xff]
    %v87 = vld [vmem:[#allocation7 + $0x68] sm:$0xff]
    %v88 = vld [vmem:[#allocation7 + $0x70] sm:$0xff]
    %v89 = vld [vmem:[#allocation7 + $0x78] sm:$0xff]
    %v90 = vld [vmem:[#allocation8] sm:$0xff]
    %v91 = vld [vmem:[#allocation8 + $0x8] sm:$0xff]
    %v92 = vld [vmem:[#allocation8 + $0x10] sm:$0xff]
    %v93 = vld [vmem:[#allocation8 + $0x18] sm:$0xff]
    %v94 = vld [vmem:[#allocation8 + $0x20] sm:$0xff]
    %v95 = vld [vmem:[#allocation8 + $0x28] sm:$0xff]
    %v96 = vld [vmem:[#allocation8 + $0x30] sm:$0xff]
    %v97 = vld [vmem:[#allocation8 + $0x38] sm:$0xff]
    %v98 = vld [vmem:[#allocation8 + $0x40] sm:$0xff]
    %v99 = vld [vmem:[#allocation8 + $0x48] sm:$0xff]
    %v100 = vld [vmem:[#allocation8 + $0x50] sm:$0xff]
    %v101 = vld [vmem:[#allocation8 + $0x58] sm:$0xff]
    %v102 = vld [vmem:[#allocation8 + $0x60] sm:$0xff]
    %v103 = vld [vmem:[#allocation8 + $0x68] sm:$0xff]
    %v104 = vld [vmem:[#allocation8 + $0x70] sm:$0xff]
    %v105 = vld [vmem:[#allocation8 + $0x78] sm:$0xff]
    %v106 = vadd.f32 %v74, %v90
    %v107 = vadd.f32 %v75, %v91
    %v108 = vadd.f32 %v76, %v92
    %v109 = vadd.f32 %v77, %v93
    %v110 = vadd.f32 %v78, %v94
    %v111 = vadd.f32 %v79, %v95
    %v112 = vadd.f32 %v80, %v96
    %v113 = vadd.f32 %v81, %v97
    %v114 = vadd.f32 %v82, %v98
    %v115 = vadd.f32 %v83, %v99
    %v116 = vadd.f32 %v84, %v100
    %v117 = vadd.f32 %v85, %v101
    %v118 = vadd.f32 %v86, %v102
    %v119 = vadd.f32 %v87, %v103
    %v120 = vadd.f32 %v88, %v104
    %v121 = vadd.f32 %v89, %v105
    %122 = vmatprep.subr.mxu0 0.0
    %123 = vmatpush1.msra.mxu0 %v74
    %124 = vmatprep.subr.mxu0 0.0
    %125 = vmatpush1.msra.mxu0 %v75
    %126 = vmatprep.subr.mxu0 0.0
    %127 = vmatpush1.msra.mxu0 %v76
    %128 = vmatprep.subr.mxu0 0.0
    %129 = vmatpush1.msra.mxu0 %v77
    %130 = vmatprep.subr.mxu0 0.0
    %131 = vmatpush1.msra.mxu0 %v78
    %132 = vmatprep.subr.mxu0 0.0
    %133 = vmatpush1.msra.mxu0 %v79
    %134 = vmatprep.subr.mxu0 0.0
    %135 = vmatpush1.msra.mxu0 %v80
    %136 = vmatprep.subr.mxu0 0.0
    %137 = vmatpush1.msra.mxu0 %v81
    %138 = vmatprep.subr.mxu0 0.0
    %139 = vmatpush1.msra.mxu0 %v82
    %140 = vmatprep.subr.mxu0 0.0
    %141 = vmatpush1.msra.mxu0 %v83
    %142 = vmatprep.subr.mxu0 0.0
    %143 = vmatpush1.msra.mxu0 %v84
    %144 = vmatprep.subr.mxu0 0.0
    %145 = vmatpush1.msra.mxu0 %v85
    %146 = vmatprep.subr.mxu0 0.0
    %147 = vmatpush1.msra.mxu0 %v86
    %148 = vmatprep.subr.mxu0 0.0
    %149 = vmatpush1.msra.mxu0 %v87
    %150 = vmatprep.subr.mxu0 0.0
    %151 = vmatpush1.msra.mxu0 %v88
    %152 = vmatprep.subr.mxu0 0.0
    %153 = vmatpush1.msra.mxu0 %v89
    %154 = vmatprep.subr.mxu0 0.0
    %155 = vmatpush1.msra.mxu0 0.0
    %156 = vmatprep.subr.mxu0 0.0
    %157 = vmatpush1.msra.mxu0 0.0
    %158 = vmatprep.subr.mxu0 0.0
    %159 = vmatpush1.msra.mxu0 0.0
    %160 = vmatprep.subr.mxu0 0.0
    %161 = vmatpush1.msra.mxu0 0.0
    %162 = vmatprep.subr.mxu0 0.0
    %163 = vmatpush1.msra.mxu0 0.0
    %164 = vmatprep.subr.mxu0 0.0
    %165 = vmatpush1.msra.mxu0 0.0
    %166 = vmatprep.subr.mxu0 0.0
    %167 = vmatpush1.msra.mxu0 0.0
    %168 = vmatprep.subr.mxu0 0.0
    %169 = vmatpush1.msra.mxu0 0.0
    %170 = vmatprep.subr.mxu0 0.0
    %171 = vmatpush1.msra.mxu0 0.0
    %172 = vmatprep.subr.mxu0 0.0
    %173 = vmatpush1.msra.mxu0 0.0
    %174 = vmatprep.subr.mxu0 0.0
    %175 = vmatpush1.msra.mxu0 0.0
    %176 = vmatprep.subr.mxu0 0.0
    %177 = vmatpush1.msra.mxu0 0.0
    %178 = vmatprep.subr.mxu0 0.0
    %179 = vmatpush1.msra.mxu0 0.0
    %180 = vmatprep.subr.mxu0 0.0
    %181 = vmatpush1.msra.mxu0 0.0
    %182 = vmatprep.subr.mxu0 0.0
    %183 = vmatpush1.msra.mxu0 0.0
    %184 = vmatprep.subr.mxu0 0.0
    %185 = vmatpush1.msra.mxu0 0.0
    %186 = vmatprep.mubr.f32.mxu0 0.0
    %187 = vmatmul.mubr.f32.gmra.mrb[0].mxu0 %v72
    %v188 = vpop.f32.mrb[0].mxu0
    %v189 = vadd.f32 0.0, %v188
    %v190 = vpop.f32.mrb[0].mxu0
    %191 = vdwg.mxu0
    %192 = vmatprep.subr.mxu0 0.0
    %193 = vmatpush1.msra.mxu0 %v90
    %194 = vmatprep.subr.mxu0 0.0
    %195 = vmatpush1.msra.mxu0 %v91
    %196 = vmatprep.subr.mxu0 0.0
    %197 = vmatpush1.msra.mxu0 %v92
    %198 = vmatprep.subr.mxu0 0.0
    %199 = vmatpush1.msra.mxu0 %v93
    %200 = vmatprep.subr.mxu0 0.0
    %201 = vmatpush1.msra.mxu0 %v94
    %202 = vmatprep.subr.mxu0 0.0
    %203 = vmatpush1.msra.mxu0 %v95
    %204 = vmatprep.subr.mxu0 0.0
    %205 = vmatpush1.msra.mxu0 %v96
    %206 = vmatprep.subr.mxu0 0.0
    %207 = vmatpush1.msra.mxu0 %v97
    %208 = vmatprep.subr.mxu0 0.0
    %209 = vmatpush1.msra.mxu0 %v98
    %210 = vmatprep.subr.mxu0 0.0
    %211 = vmatpush1.msra.mxu0 %v99
    %212 = vmatprep.subr.mxu0 0.0
    %213 = vmatpush1.msra.mxu0 %v100
    %214 = vmatprep.subr.mxu0 0.0
    %215 = vmatpush1.msra.mxu0 %v101
    %216 = vmatprep.subr.mxu0 0.0
    %217 = vmatpush1.msra.mxu0 %v102
    %218 = vmatprep.subr.mxu0 0.0
    %219 = vmatpush1.msra.mxu0 %v103
    %220 = vmatprep.subr.mxu0 0.0
    %221 = vmatpush1.msra.mxu0 %v104
    %222 = vmatprep.subr.mxu0 0.0
    %223 = vmatpush1.msra.mxu0 %v105
    %224 = vmatprep.subr.mxu0 0.0
    %225 = vmatpush1.msra.mxu0 0.0
    %226 = vmatprep.subr.mxu0 0.0
    %227 = vmatpush1.msra.mxu0 0.0
    %228 = vmatprep.subr.mxu0 0.0
    %229 = vmatpush1.msra.mxu0 0.0
    %230 = vmatprep.subr.mxu0 0.0
    %231 = vmatpush1.msra.mxu0 0.0
    %232 = vmatprep.subr.mxu0 0.0
    %233 = vmatpush1.msra.mxu0 0.0
    %234 = vmatprep.subr.mxu0 0.0
    %235 = vmatpush1.msra.mxu0 0.0
    %236 = vmatprep.subr.mxu0 0.0
    %237 = vmatpush1.msra.mxu0 0.0
    %238 = vmatprep.subr.mxu0 0.0
    %239 = vmatpush1.msra.mxu0 0.0
    %240 = vmatprep.subr.mxu0 0.0
    %241 = vmatpush1.msra.mxu0 0.0
    %242 = vmatprep.subr.mxu0 0.0
    %243 = vmatpush1.msra.mxu0 0.0
    %244 = vmatprep.subr.mxu0 0.0
    %245 = vmatpush1.msra.mxu0 0.0
    %246 = vmatprep.subr.mxu0 0.0
    %247 = vmatpush1.msra.mxu0 0.0
    %248 = vmatprep.subr.mxu0 0.0
    %249 = vmatpush1.msra.mxu0 0.0
    %250 = vmatprep.subr.mxu0 0.0
    %251 = vmatpush1.msra.mxu0 0.0
    %252 = vmatprep.subr.mxu0 0.0
    %253 = vmatpush1.msra.mxu0 0.0
    %254 = vmatprep.subr.mxu0 0.0
    %255 = vmatpush1.msra.mxu0 0.0
    %256 = vmatprep.mubr.f32.mxu0 0.0
    %257 = vmatmul.mubr.f32.gmra.mrb[0].mxu0 %v73
    %v258 = vpop.f32.mrb[0].mxu0
    %v259 = vadd.f32 0.0, %v258
    %v260 = vpop.f32.mrb[0].mxu0
    %261 = vdwg.mxu0
    %v262 = vadd.f32 %v72, %v73
    %263 = vmatprep.subr.mxu0 0.0
    %264 = vmatpush1.msra.mxu0 %v106
    %265 = vmatprep.subr.mxu0 0.0
    %266 = vmatpush1.msra.mxu0 %v107
    %267 = vmatprep.subr.mxu0 0.0
    %268 = vmatpush1.msra.mxu0 %v108
    %269 = vmatprep.subr.mxu0 0.0
    %270 = vmatpush1.msra.mxu0 %v109
    %271 = vmatprep.subr.mxu0 0.0
    %272 = vmatpush1.msra.mxu0 %v110
    %273 = vmatprep.subr.mxu0 0.0
    %274 = vmatpush1.msra.mxu0 %v111
    %275 = vmatprep.subr.mxu0 0.0
    %276 = vmatpush1.msra.mxu0 %v112
    %277 = vmatprep.subr.mxu0 0.0
    %278 = vmatpush1.msra.mxu0 %v113
    %279 = vmatprep.subr.mxu0 0.0
    %280 = vmatpush1.msra.mxu0 %v114
    %281 = vmatprep.subr.mxu0 0.0
    %282 = vmatpush1.msra.mxu0 %v115
    %283 = vmatprep.subr.mxu0 0.0
    %284 = vmatpush1.msra.mxu0 %v116
    %285 = vmatprep.subr.mxu0 0.0
    %286 = vmatpush1.msra.mxu0 %v117
    %287 = vmatprep.subr.mxu0 0.0
    %288 = vmatpush1.msra.mxu0 %v118
    %289 = vmatprep.subr.mxu0 0.0
    %290 = vmatpush1.msra.mxu0 %v119
    %291 = vmatprep.subr.mxu0 0.0
    %292 = vmatpush1.msra.mxu0 %v120
    %293 = vmatprep.subr.mxu0 0.0
    %294 = vmatpush1.msra.mxu0 %v121
    %295 = vmatprep.subr.mxu0 0.0
    %296 = vmatpush1.msra.mxu0 0.0
    %297 = vmatprep.subr.mxu0 0.0
    %298 = vmatpush1.msra.mxu0 0.0
    %299 = vmatprep.subr.mxu0 0.0
    %300 = vmatpush1.msra.mxu0 0.0
    %301 = vmatprep.subr.mxu0 0.0
    %302 = vmatpush1.msra.mxu0 0.0
    %303 = vmatprep.subr.mxu0 0.0
    %304 = vmatpush1.msra.mxu0 0.0
    %305 = vmatprep.subr.mxu0 0.0
    %306 = vmatpush1.msra.mxu0 0.0
    %307 = vmatprep.subr.mxu0 0.0
    %308 = vmatpush1.msra.mxu0 0.0
    %309 = vmatprep.subr.mxu0 0.0
    %310 = vmatpush1.msra.mxu0 0.0
    %311 = vmatprep.subr.mxu0 0.0
    %312 = vmatpush1.msra.mxu0 0.0
    %313 = vmatprep.subr.mxu0 0.0
    %314 = vmatpush1.msra.mxu0 0.0
    %315 = vmatprep.subr.mxu0 0.0
    %316 = vmatpush1.msra.mxu0 0.0
    %317 = vmatprep.subr.mxu0 0.0
    %318 = vmatpush1.msra.mxu0 0.0
    %319 = vmatprep.subr.mxu0 0.0
    %320 = vmatpush1.msra.mxu0 0.0
    %321 = vmatprep.subr.mxu0 0.0
    %322 = vmatpush1.msra.mxu0 0.0
    %323 = vmatprep.subr.mxu0 0.0
    %324 = vmatpush1.msra.mxu0 0.0
    %325 = vmatprep.subr.mxu0 0.0
    %326 = vmatpush1.msra.mxu0 0.0
    %327 = vmatprep.mubr.f32.mxu0 0.0
    %328 = vmatmul.mubr.f32.gmra.mrb[0].mxu0 %v262
    %v329 = vpop.f32.mrb[0].mxu0
    %v330 = vadd.f32 0.0, %v329
    %v331 = vpop.f32.mrb[0].mxu0
    %332 = vdwg.mxu0
    %v333 = vsub.f32 %v189, %v259
    %v334 = vsub.f32 %v330, %v189
    %v335 = vsub.f32 %v334, %v259
    %s336 = scalar_lea.vmem [#allocation7], 128
    %v337 = vld [vmem:[%s336] sm:$0xff]
    %v338 = vld [vmem:[%s336 + $0x8] sm:$0xff]
    %v339 = vld [vmem:[%s336 + $0x10] sm:$0xff]
    %v340 = vld [vmem:[%s336 + $0x18] sm:$0xff]
    %v341 = vld [vmem:[%s336 + $0x20] sm:$0xff]
    %v342 = vld [vmem:[%s336 + $0x28] sm:$0xff]
    %v343 = vld [vmem:[%s336 + $0x30] sm:$0xff]
    %v344 = vld [vmem:[%s336 + $0x38] sm:$0xff]
    %v345 = vld [vmem:[%s336 + $0x40] sm:$0xff]
    %v346 = vld [vmem:[%s336 + $0x48] sm:$0xff]
    %v347 = vld [vmem:[%s336 + $0x50] sm:$0xff]
    %v348 = vld [vmem:[%s336 + $0x58] sm:$0xff]
    %v349 = vld [vmem:[%s336 + $0x60] sm:$0xff]
    %v350 = vld [vmem:[%s336 + $0x68] sm:$0xff]
    %v351 = vld [vmem:[%s336 + $0x70] sm:$0xff]
    %v352 = vld [vmem:[%s336 + $0x78] sm:$0xff]
    %s353 = scalar_lea.vmem [#allocation8], 128
    %v354 = vld [vmem:[%s353] sm:$0xff]
    %v355 = vld [vmem:[%s353 + $0x8] sm:$0xff]
    %v356 = vld [vmem:[%s353 + $0x10] sm:$0xff]
    %v357 = vld [vmem:[%s353 + $0x18] sm:$0xff]
    %v358 = vld [vmem:[%s353 + $0x20] sm:$0xff]
    %v359 = vld [vmem:[%s353 + $0x28] sm:$0xff]
    %v360 = vld [vmem:[%s353 + $0x30] sm:$0xff]
    %v361 = vld [vmem:[%s353 + $0x38] sm:$0xff]
    %v362 = vld [vmem:[%s353 + $0x40] sm:$0xff]
    %v363 = vld [vmem:[%s353 + $0x48] sm:$0xff]
    %v364 = vld [vmem:[%s353 + $0x50] sm:$0xff]
    %v365 = vld [vmem:[%s353 + $0x58] sm:$0xff]
    %v366 = vld [vmem:[%s353 + $0x60] sm:$0xff]
    %v367 = vld [vmem:[%s353 + $0x68] sm:$0xff]
    %v368 = vld [vmem:[%s353 + $0x70] sm:$0xff]
    %v369 = vld [vmem:[%s353 + $0x78] sm:$0xff]
    %v370 = vadd.f32 %v337, %v354
    %v371 = vadd.f32 %v338, %v355
    %v372 = vadd.f32 %v339, %v356
    %v373 = vadd.f32 %v340, %v357
    %v374 = vadd.f32 %v341, %v358
    %v375 = vadd.f32 %v342, %v359
    %v376 = vadd.f32 %v343, %v360
    %v377 = vadd.f32 %v344, %v361
    %v378 = vadd.f32 %v345, %v362
    %v379 = vadd.f32 %v346, %v363
    %v380 = vadd.f32 %v347, %v364
    %v381 = vadd.f32 %v348, %v365
    %v382 = vadd.f32 %v349, %v366
    %v383 = vadd.f32 %v350, %v367
    %v384 = vadd.f32 %v351, %v368
    %v385 = vadd.f32 %v352, %v369
    %386 = vmatprep.subr.mxu0 0.0
    %387 = vmatpush1.msra.mxu0 %v337
    %388 = vmatprep.subr.mxu0 0.0
    %389 = vmatpush1.msra.mxu0 %v338
    %390 = vmatprep.subr.mxu0 0.0
    %391 = vmatpush1.msra.mxu0 %v339
    %392 = vmatprep.subr.mxu0 0.0
    %393 = vmatpush1.msra.mxu0 %v340
    %394 = vmatprep.subr.mxu0 0.0
    %395 = vmatpush1.msra.mxu0 %v341
    %396 = vmatprep.subr.mxu0 0.0
    %397 = vmatpush1.msra.mxu0 %v342
    %398 = vmatprep.subr.mxu0 0.0
    %399 = vmatpush1.msra.mxu0 %v343
    %400 = vmatprep.subr.mxu0 0.0
    %401 = vmatpush1.msra.mxu0 %v344
    %402 = vmatprep.subr.mxu0 0.0
    %403 = vmatpush1.msra.mxu0 %v345
    %404 = vmatprep.subr.mxu0 0.0
    %405 = vmatpush1.msra.mxu0 %v346
    %406 = vmatprep.subr.mxu0 0.0
    %407 = vmatpush1.msra.mxu0 %v347
    %408 = vmatprep.subr.mxu0 0.0
    %409 = vmatpush1.msra.mxu0 %v348
    %410 = vmatprep.subr.mxu0 0.0
    %411 = vmatpush1.msra.mxu0 %v349
    %412 = vmatprep.subr.mxu0 0.0
    %413 = vmatpush1.msra.mxu0 %v350
    %414 = vmatprep.subr.mxu0 0.0
    %415 = vmatpush1.msra.mxu0 %v351
    %416 = vmatprep.subr.mxu0 0.0
    %417 = vmatpush1.msra.mxu0 %v352
    %418 = vmatprep.subr.mxu0 0.0
    %419 = vmatpush1.msra.mxu0 0.0
    %420 = vmatprep.subr.mxu0 0.0
    %421 = vmatpush1.msra.mxu0 0.0
    %422 = vmatprep.subr.mxu0 0.0
    %423 = vmatpush1.msra.mxu0 0.0
    %424 = vmatprep.subr.mxu0 0.0
    %425 = vmatpush1.msra.mxu0 0.0
    %426 = vmatprep.subr.mxu0 0.0
    %427 = vmatpush1.msra.mxu0 0.0
    %428 = vmatprep.subr.mxu0 0.0
    %429 = vmatpush1.msra.mxu0 0.0
    %430 = vmatprep.subr.mxu0 0.0
    %431 = vmatpush1.msra.mxu0 0.0
    %432 = vmatprep.subr.mxu0 0.0
    %433 = vmatpush1.msra.mxu0 0.0
    %434 = vmatprep.subr.mxu0 0.0
    %435 = vmatpush1.msra.mxu0 0.0
    %436 = vmatprep.subr.mxu0 0.0
    %437 = vmatpush1.msra.mxu0 0.0
    %438 = vmatprep.subr.mxu0 0.0
    %439 = vmatpush1.msra.mxu0 0.0
    %440 = vmatprep.subr.mxu0 0.0
    %441 = vmatpush1.msra.mxu0 0.0
    %442 = vmatprep.subr.mxu0 0.0
    %443 = vmatpush1.msra.mxu0 0.0
    %444 = vmatprep.subr.mxu0 0.0
    %445 = vmatpush1.msra.mxu0 0.0
    %446 = vmatprep.subr.mxu0 0.0
    %447 = vmatpush1.msra.mxu0 0.0
    %448 = vmatprep.subr.mxu0 0.0
    %449 = vmatpush1.msra.mxu0 0.0
    %450 = vmatprep.mubr.f32.mxu0 0.0
    %451 = vmatmul.mubr.f32.gmra.mrb[0].mxu0 %v333
    %v452 = vpop.f32.mrb[0].mxu0
    %v453 = vadd.f32 0.0, %v452
    %v454 = vpop.f32.mrb[0].mxu0
    %455 = vdwg.mxu0
    %456 = vmatprep.subr.mxu0 0.0
    %457 = vmatpush1.msra.mxu0 %v354
    %458 = vmatprep.subr.mxu0 0.0
    %459 = vmatpush1.msra.mxu0 %v355
    %460 = vmatprep.subr.mxu0 0.0
    %461 = vmatpush1.msra.mxu0 %v356
    %462 = vmatprep.subr.mxu0 0.0
    %463 = vmatpush1.msra.mxu0 %v357
    %464 = vmatprep.subr.mxu0 0.0
    %465 = vmatpush1.msra.mxu0 %v358
    %466 = vmatprep.subr.mxu0 0.0
    %467 = vmatpush1.msra.mxu0 %v359
    %468 = vmatprep.subr.mxu0 0.0
    %469 = vmatpush1.msra.mxu0 %v360
    %470 = vmatprep.subr.mxu0 0.0
    %471 = vmatpush1.msra.mxu0 %v361
    %472 = vmatprep.subr.mxu0 0.0
    %473 = vmatpush1.msra.mxu0 %v362
    %474 = vmatprep.subr.mxu0 0.0
    %475 = vmatpush1.msra.mxu0 %v363
    %476 = vmatprep.subr.mxu0 0.0
    %477 = vmatpush1.msra.mxu0 %v364
    %478 = vmatprep.subr.mxu0 0.0
    %479 = vmatpush1.msra.mxu0 %v365
    %480 = vmatprep.subr.mxu0 0.0
    %481 = vmatpush1.msra.mxu0 %v366
    %482 = vmatprep.subr.mxu0 0.0
    %483 = vmatpush1.msra.mxu0 %v367
    %484 = vmatprep.subr.mxu0 0.0
    %485 = vmatpush1.msra.mxu0 %v368
    %486 = vmatprep.subr.mxu0 0.0
    %487 = vmatpush1.msra.mxu0 %v369
    %488 = vmatprep.subr.mxu0 0.0
    %489 = vmatpush1.msra.mxu0 0.0
    %490 = vmatprep.subr.mxu0 0.0
    %491 = vmatpush1.msra.mxu0 0.0
    %492 = vmatprep.subr.mxu0 0.0
    %493 = vmatpush1.msra.mxu0 0.0
    %494 = vmatprep.subr.mxu0 0.0
    %495 = vmatpush1.msra.mxu0 0.0
    %496 = vmatprep.subr.mxu0 0.0
    %497 = vmatpush1.msra.mxu0 0.0
    %498 = vmatprep.subr.mxu0 0.0
    %499 = vmatpush1.msra.mxu0 0.0
    %500 = vmatprep.subr.mxu0 0.0
    %501 = vmatpush1.msra.mxu0 0.0
    %502 = vmatprep.subr.mxu0 0.0
    %503 = vmatpush1.msra.mxu0 0.0
    %504 = vmatprep.subr.mxu0 0.0
    %505 = vmatpush1.msra.mxu0 0.0
    %506 = vmatprep.subr.mxu0 0.0
    %507 = vmatpush1.msra.mxu0 0.0
    %508 = vmatprep.subr.mxu0 0.0
    %509 = vmatpush1.msra.mxu0 0.0
    %510 = vmatprep.subr.mxu0 0.0
    %511 = vmatpush1.msra.mxu0 0.0
    %512 = vmatprep.subr.mxu0 0.0
    %513 = vmatpush1.msra.mxu0 0.0
    %514 = vmatprep.subr.mxu0 0.0
    %515 = vmatpush1.msra.mxu0 0.0
    %516 = vmatprep.subr.mxu0 0.0
    %517 = vmatpush1.msra.mxu0 0.0
    %518 = vmatprep.subr.mxu0 0.0
    %519 = vmatpush1.msra.mxu0 0.0
    %520 = vmatprep.mubr.f32.mxu0 0.0
    %521 = vmatmul.mubr.f32.gmra.mrb[0].mxu0 %v335
    %v522 = vpop.f32.mrb[0].mxu0
    %v523 = vadd.f32 0.0, %v522
    %v524 = vpop.f32.mrb[0].mxu0
    %525 = vdwg.mxu0
    %v526 = vadd.f32 %v333, %v335
    %527 = vmatprep.subr.mxu0 0.0
    %528 = vmatpush1.msra.mxu0 %v370
    %529 = vmatprep.subr.mxu0 0.0
    %530 = vmatpush1.msra.mxu0 %v371
    %531 = vmatprep.subr.mxu0 0.0
    %532 = vmatpush1.msra.mxu0 %v372
    %533 = vmatprep.subr.mxu0 0.0
    %534 = vmatpush1.msra.mxu0 %v373
    %535 = vmatprep.subr.mxu0 0.0
    %536 = vmatpush1.msra.mxu0 %v374
    %537 = vmatprep.subr.mxu0 0.0
    %538 = vmatpush1.msra.mxu0 %v375
    %539 = vmatprep.subr.mxu0 0.0
    %540 = vmatpush1.msra.mxu0 %v376
    %541 = vmatprep.subr.mxu0 0.0
    %542 = vmatpush1.msra.mxu0 %v377
    %543 = vmatprep.subr.mxu0 0.0
    %544 = vmatpush1.msra.mxu0 %v378
    %545 = vmatprep.subr.mxu0 0.0
    %546 = vmatpush1.msra.mxu0 %v379
    %547 = vmatprep.subr.mxu0 0.0
    %548 = vmatpush1.msra.mxu0 %v380
    %549 = vmatprep.subr.mxu0 0.0
    %550 = vmatpush1.msra.mxu0 %v381
    %551 = vmatprep.subr.mxu0 0.0
    %552 = vmatpush1.msra.mxu0 %v382
    %553 = vmatprep.subr.mxu0 0.0
    %554 = vmatpush1.msra.mxu0 %v383
    %555 = vmatprep.subr.mxu0 0.0
    %556 = vmatpush1.msra.mxu0 %v384
    %557 = vmatprep.subr.mxu0 0.0
    %558 = vmatpush1.msra.mxu0 %v385
    %559 = vmatprep.subr.mxu0 0.0
    %560 = vmatpush1.msra.mxu0 0.0
    %561 = vmatprep.subr.mxu0 0.0
    %562 = vmatpush1.msra.mxu0 0.0
    %563 = vmatprep.subr.mxu0 0.0
    %564 = vmatpush1.msra.mxu0 0.0
    %565 = vmatprep.subr.mxu0 0.0
    %566 = vmatpush1.msra.mxu0 0.0
    %567 = vmatprep.subr.mxu0 0.0
    %568 = vmatpush1.msra.mxu0 0.0
    %569 = vmatprep.subr.mxu0 0.0
    %570 = vmatpush1.msra.mxu0 0.0
    %571 = vmatprep.subr.mxu0 0.0
    %572 = vmatpush1.msra.mxu0 0.0
    %573 = vmatprep.subr.mxu0 0.0
    %574 = vmatpush1.msra.mxu0 0.0
    %575 = vmatprep.subr.mxu0 0.0
    %576 = vmatpush1.msra.mxu0 0.0
    %577 = vmatprep.subr.mxu0 0.0
    %578 = vmatpush1.msra.mxu0 0.0
    %579 = vmatprep.subr.mxu0 0.0
    %580 = vmatpush1.msra.mxu0 0.0
    %581 = vmatprep.subr.mxu0 0.0
    %582 = vmatpush1.msra.mxu0 0.0
    %583 = vmatprep.subr.mxu0 0.0
    %584 = vmatpush1.msra.mxu0 0.0
    %585 = vmatprep.subr.mxu0 0.0
    %586 = vmatpush1.msra.mxu0 0.0
    %587 = vmatprep.subr.mxu0 0.0
    %588 = vmatpush1.msra.mxu0 0.0
    %589 = vmatprep.subr.mxu0 0.0
    %590 = vmatpush1.msra.mxu0 0.0
    %591 = vmatprep.mubr.f32.mxu0 0.0
    %592 = vmatmul.mubr.f32.gmra.mrb[0].mxu0 %v526
    %v593 = vpop.f32.mrb[0].mxu0
    %v594 = vadd.f32 0.0, %v593
    %v595 = vpop.f32.mrb[0].mxu0
    %596 = vdwg.mxu0
    %v597 = vsub.f32 %v453, %v523
    %v598 = vsub.f32 %v594, %v453
    %v599 = vsub.f32 %v598, %v523
    %s600 = scalar_lea.vmem [#allocation7], 256
    %v601 = vld [vmem:[%s600] sm:$0xff]
    %v602 = vld [vmem:[%s600 + $0x8] sm:$0xff]
    %v603 = vld [vmem:[%s600 + $0x10] sm:$0xff]
    %v604 = vld [vmem:[%s600 + $0x18] sm:$0xff]
    %v605 = vld [vmem:[%s600 + $0x20] sm:$0xff]
    %v606 = vld [vmem:[%s600 + $0x28] sm:$0xff]
    %v607 = vld [vmem:[%s600 + $0x30] sm:$0xff]
    %v608 = vld [vmem:[%s600 + $0x38] sm:$0xff]
    %v609 = vld [vmem:[%s600 + $0x40] sm:$0xff]
    %v610 = vld [vmem:[%s600 + $0x48] sm:$0xff]
    %v611 = vld [vmem:[%s600 + $0x50] sm:$0xff]
    %v612 = vld [vmem:[%s600 + $0x58] sm:$0xff]
    %v613 = vld [vmem:[%s600 + $0x60] sm:$0xff]
    %v614 = vld [vmem:[%s600 + $0x68] sm:$0xff]
    %v615 = vld [vmem:[%s600 + $0x70] sm:$0xff]
    %v616 = vld [vmem:[%s600 + $0x78] sm:$0xff]
    %s617 = scalar_lea.vmem [#allocation8], 256
    %v618 = vld [vmem:[%s617] sm:$0xff]
    %v619 = vld [vmem:[%s617 + $0x8] sm:$0xff]
    %v620 = vld [vmem:[%s617 + $0x10] sm:$0xff]
    %v621 = vld [vmem:[%s617 + $0x18] sm:$0xff]
    %v622 = vld [vmem:[%s617 + $0x20] sm:$0xff]
    %v623 = vld [vmem:[%s617 + $0x28] sm:$0xff]
    %v624 = vld [vmem:[%s617 + $0x30] sm:$0xff]
    %v625 = vld [vmem:[%s617 + $0x38] sm:$0xff]
    %v626 = vld [vmem:[%s617 + $0x40] sm:$0xff]
    %v627 = vld [vmem:[%s617 + $0x48] sm:$0xff]
    %v628 = vld [vmem:[%s617 + $0x50] sm:$0xff]
    %v629 = vld [vmem:[%s617 + $0x58] sm:$0xff]
    %v630 = vld [vmem:[%s617 + $0x60] sm:$0xff]
    %v631 = vld [vmem:[%s617 + $0x68] sm:$0xff]
    %v632 = vld [vmem:[%s617 + $0x70] sm:$0xff]
    %v633 = vld [vmem:[%s617 + $0x78] sm:$0xff]
    %v634 = vadd.f32 %v601, %v618
    %v635 = vadd.f32 %v602, %v619
    %v636 = vadd.f32 %v603, %v620
    %v637 = vadd.f32 %v604, %v621
    %v638 = vadd.f32 %v605, %v622
    %v639 = vadd.f32 %v606, %v623
    %v640 = vadd.f32 %v607, %v624
    %v641 = vadd.f32 %v608, %v625
    %v642 = vadd.f32 %v609, %v626
    %v643 = vadd.f32 %v610, %v627
    %v644 = vadd.f32 %v611, %v628
    %v645 = vadd.f32 %v612, %v629
    %v646 = vadd.f32 %v613, %v630
    %v647 = vadd.f32 %v614, %v631
    %v648 = vadd.f32 %v615, %v632
    %v649 = vadd.f32 %v616, %v633
    %650 = vmatprep.subr.mxu0 0.0
    %651 = vmatpush1.msra.mxu0 %v601
    %652 = vmatprep.subr.mxu0 0.0
    %653 = vmatpush1.msra.mxu0 %v602
    %654 = vmatprep.subr.mxu0 0.0
    %655 = vmatpush1.msra.mxu0 %v603
    %656 = vmatprep.subr.mxu0 0.0
    %657 = vmatpush1.msra.mxu0 %v604
    %658 = vmatprep.subr.mxu0 0.0
    %659 = vmatpush1.msra.mxu0 %v605
    %660 = vmatprep.subr.mxu0 0.0
    %661 = vmatpush1.msra.mxu0 %v606
    %662 = vmatprep.subr.mxu0 0.0
    %663 = vmatpush1.msra.mxu0 %v607
    %664 = vmatprep.subr.mxu0 0.0
    %665 = vmatpush1.msra.mxu0 %v608
    %666 = vmatprep.subr.mxu0 0.0
    %667 = vmatpush1.msra.mxu0 %v609
    %668 = vmatprep.subr.mxu0 0.0
    %669 = vmatpush1.msra.mxu0 %v610
    %670 = vmatprep.subr.mxu0 0.0
    %671 = vmatpush1.msra.mxu0 %v611
    %672 = vmatprep.subr.mxu0 0.0
    %673 = vmatpush1.msra.mxu0 %v612
    %674 = vmatprep.subr.mxu0 0.0
    %675 = vmatpush1.msra.mxu0 %v613
    %676 = vmatprep.subr.mxu0 0.0
    %677 = vmatpush1.msra.mxu0 %v614
    %678 = vmatprep.subr.mxu0 0.0
    %679 = vmatpush1.msra.mxu0 %v615
    %680 = vmatprep.subr.mxu0 0.0
    %681 = vmatpush1.msra.mxu0 %v616
    %682 = vmatprep.subr.mxu0 0.0
    %683 = vmatpush1.msra.mxu0 0.0
    %684 = vmatprep.subr.mxu0 0.0
    %685 = vmatpush1.msra.mxu0 0.0
    %686 = vmatprep.subr.mxu0 0.0
    %687 = vmatpush1.msra.mxu0 0.0
    %688 = vmatprep.subr.mxu0 0.0
    %689 = vmatpush1.msra.mxu0 0.0
    %690 = vmatprep.subr.mxu0 0.0
    %691 = vmatpush1.msra.mxu0 0.0
    %692 = vmatprep.subr.mxu0 0.0
    %693 = vmatpush1.msra.mxu0 0.0
    %694 = vmatprep.subr.mxu0 0.0
    %695 = vmatpush1.msra.mxu0 0.0
    %696 = vmatprep.subr.mxu0 0.0
    %697 = vmatpush1.msra.mxu0 0.0
    %698 = vmatprep.subr.mxu0 0.0
    %699 = vmatpush1.msra.mxu0 0.0
    %700 = vmatprep.subr.mxu0 0.0
    %701 = vmatpush1.msra.mxu0 0.0
    %702 = vmatprep.subr.mxu0 0.0
    %703 = vmatpush1.msra.mxu0 0.0
    %704 = vmatprep.subr.mxu0 0.0
    %705 = vmatpush1.msra.mxu0 0.0
    %706 = vmatprep.subr.mxu0 0.0
    %707 = vmatpush1.msra.mxu0 0.0
    %708 = vmatprep.subr.mxu0 0.0
    %709 = vmatpush1.msra.mxu0 0.0
    %710 = vmatprep.subr.mxu0 0.0
    %711 = vmatpush1.msra.mxu0 0.0
    %712 = vmatprep.subr.mxu0 0.0
    %713 = vmatpush1.msra.mxu0 0.0
    %714 = vmatprep.mubr.f32.mxu0 0.0
    %715 = vmatmul.mubr.f32.gmra.mrb[0].mxu0 %v597
    %v716 = vpop.f32.mrb[0].mxu0
    %v717 = vadd.f32 0.0, %v716
    %v718 = vpop.f32.mrb[0].mxu0
    %719 = vdwg.mxu0
    %720 = vmatprep.subr.mxu0 0.0
    %721 = vmatpush1.msra.mxu0 %v618
    %722 = vmatprep.subr.mxu0 0.0
    %723 = vmatpush1.msra.mxu0 %v619
    %724 = vmatprep.subr.mxu0 0.0
    %725 = vmatpush1.msra.mxu0 %v620
    %726 = vmatprep.subr.mxu0 0.0
    %727 = vmatpush1.msra.mxu0 %v621
    %728 = vmatprep.subr.mxu0 0.0
    %729 = vmatpush1.msra.mxu0 %v622
    %730 = vmatprep.subr.mxu0 0.0
    %731 = vmatpush1.msra.mxu0 %v623
    %732 = vmatprep.subr.mxu0 0.0
    %733 = vmatpush1.msra.mxu0 %v624
    %734 = vmatprep.subr.mxu0 0.0
    %735 = vmatpush1.msra.mxu0 %v625
    %736 = vmatprep.subr.mxu0 0.0
    %737 = vmatpush1.msra.mxu0 %v626
    %738 = vmatprep.subr.mxu0 0.0
    %739 = vmatpush1.msra.mxu0 %v627
    %740 = vmatprep.subr.mxu0 0.0
    %741 = vmatpush1.msra.mxu0 %v628
    %742 = vmatprep.subr.mxu0 0.0
    %743 = vmatpush1.msra.mxu0 %v629
    %744 = vmatprep.subr.mxu0 0.0
    %745 = vmatpush1.msra.mxu0 %v630
    %746 = vmatprep.subr.mxu0 0.0
    %747 = vmatpush1.msra.mxu0 %v631
    %748 = vmatprep.subr.mxu0 0.0
    %749 = vmatpush1.msra.mxu0 %v632
    %750 = vmatprep.subr.mxu0 0.0
    %751 = vmatpush1.msra.mxu0 %v633
    %752 = vmatprep.subr.mxu0 0.0
    %753 = vmatpush1.msra.mxu0 0.0
    %754 = vmatprep.subr.mxu0 0.0
    %755 = vmatpush1.msra.mxu0 0.0
    %756 = vmatprep.subr.mxu0 0.0
    %757 = vmatpush1.msra.mxu0 0.0
    %758 = vmatprep.subr.mxu0 0.0
    %759 = vmatpush1.msra.mxu0 0.0
    %760 = vmatprep.subr.mxu0 0.0
    %761 = vmatpush1.msra.mxu0 0.0
    %762 = vmatprep.subr.mxu0 0.0
    %763 = vmatpush1.msra.mxu0 0.0
    %764 = vmatprep.subr.mxu0 0.0
    %765 = vmatpush1.msra.mxu0 0.0
    %766 = vmatprep.subr.mxu0 0.0
    %767 = vmatpush1.msra.mxu0 0.0
    %768 = vmatprep.subr.mxu0 0.0
    %769 = vmatpush1.msra.mxu0 0.0
    %770 = vmatprep.subr.mxu0 0.0
    %771 = vmatpush1.msra.mxu0 0.0
    %772 = vmatprep.subr.mxu0 0.0
    %773 = vmatpush1.msra.mxu0 0.0
    %774 = vmatprep.subr.mxu0 0.0
    %775 = vmatpush1.msra.mxu0 0.0
    %776 = vmatprep.subr.mxu0 0.0
    %777 = vmatpush1.msra.mxu0 0.0
    %778 = vmatprep.subr.mxu0 0.0
    %779 = vmatpush1.msra.mxu0 0.0
    %780 = vmatprep.subr.mxu0 0.0
    %781 = vmatpush1.msra.mxu0 0.0
    %782 = vmatprep.subr.mxu0 0.0
    %783 = vmatpush1.msra.mxu0 0.0
    %784 = vmatprep.mubr.f32.mxu0 0.0
    %785 = vmatmul.mubr.f32.gmra.mrb[0].mxu0 %v599
    %v786 = vpop.f32.mrb[0].mxu0
    %v787 = vadd.f32 0.0, %v786
    %v788 = vpop.f32.mrb[0].mxu0
    %789 = vdwg.mxu0
    %v790 = vadd.f32 %v597, %v599
    %791 = vmatprep.subr.mxu0 0.0
    %792 = vmatpush1.msra.mxu0 %v634
    %793 = vmatprep.subr.mxu0 0.0
    %794 = vmatpush1.msra.mxu0 %v635
    %795 = vmatprep.subr.mxu0 0.0
    %796 = vmatpush1.msra.mxu0 %v636
    %797 = vmatprep.subr.mxu0 0.0
    %798 = vmatpush1.msra.mxu0 %v637
    %799 = vmatprep.subr.mxu0 0.0
    %800 = vmatpush1.msra.mxu0 %v638
    %801 = vmatprep.subr.mxu0 0.0
    %802 = vmatpush1.msra.mxu0 %v639
    %803 = vmatprep.subr.mxu0 0.0
    %804 = vmatpush1.msra.mxu0 %v640
    %805 = vmatprep.subr.mxu0 0.0
    %806 = vmatpush1.msra.mxu0 %v641
    %807 = vmatprep.subr.mxu0 0.0
    %808 = vmatpush1.msra.mxu0 %v642
    %809 = vmatprep.subr.mxu0 0.0
    %810 = vmatpush1.msra.mxu0 %v643
    %811 = vmatprep.subr.mxu0 0.0
    %812 = vmatpush1.msra.mxu0 %v644
    %813 = vmatprep.subr.mxu0 0.0
    %814 = vmatpush1.msra.mxu0 %v645
    %815 = vmatprep.subr.mxu0 0.0
    %816 = vmatpush1.msra.mxu0 %v646
    %817 = vmatprep.subr.mxu0 0.0
    %818 = vmatpush1.msra.mxu0 %v647
    %819 = vmatprep.subr.mxu0 0.0
    %820 = vmatpush1.msra.mxu0 %v648
    %821 = vmatprep.subr.mxu0 0.0
    %822 = vmatpush1.msra.mxu0 %v649
    %823 = vmatprep.subr.mxu0 0.0
    %824 = vmatpush1.msra.mxu0 0.0
    %825 = vmatprep.subr.mxu0 0.0
    %826 = vmatpush1.msra.mxu0 0.0
    %827 = vmatprep.subr.mxu0 0.0
    %828 = vmatpush1.msra.mxu0 0.0
    %829 = vmatprep.subr.mxu0 0.0
    %830 = vmatpush1.msra.mxu0 0.0
    %831 = vmatprep.subr.mxu0 0.0
    %832 = vmatpush1.msra.mxu0 0.0
    %833 = vmatprep.subr.mxu0 0.0
    %834 = vmatpush1.msra.mxu0 0.0
    %835 = vmatprep.subr.mxu0 0.0
    %836 = vmatpush1.msra.mxu0 0.0
    %837 = vmatprep.subr.mxu0 0.0
    %838 = vmatpush1.msra.mxu0 0.0
    %839 = vmatprep.subr.mxu0 0.0
    %840 = vmatpush1.msra.mxu0 0.0
    %841 = vmatprep.subr.mxu0 0.0
    %842 = vmatpush1.msra.mxu0 0.0
    %843 = vmatprep.subr.mxu0 0.0
    %844 = vmatpush1.msra.mxu0 0.0
    %845 = vmatprep.subr.mxu0 0.0
    %846 = vmatpush1.msra.mxu0 0.0
    %847 = vmatprep.subr.mxu0 0.0
    %848 = vmatpush1.msra.mxu0 0.0
    %849 = vmatprep.subr.mxu0 0.0
    %850 = vmatpush1.msra.mxu0 0.0
    %851 = vmatprep.subr.mxu0 0.0
    %852 = vmatpush1.msra.mxu0 0.0
    %853 = vmatprep.subr.mxu0 0.0
    %854 = vmatpush1.msra.mxu0 0.0
    %855 = vmatprep.mubr.f32.mxu0 0.0
    %856 = vmatmul.mubr.f32.gmra.mrb[0].mxu0 %v790
    %v857 = vpop.f32.mrb[0].mxu0
    %v858 = vadd.f32 0.0, %v857
    %v859 = vpop.f32.mrb[0].mxu0
    %860 = vdwg.mxu0
    %v861 = vsub.f32 %v717, %v787
    %v862 = vsub.f32 %v858, %v717
    %v863 = vsub.f32 %v862, %v787
    %s864 = scalar_lea.vmem [#allocation7], 384
    %v865 = vld [vmem:[%s864] sm:$0xff]
    %v866 = vld [vmem:[%s864 + $0x8] sm:$0xff]
    %v867 = vld [vmem:[%s864 + $0x10] sm:$0xff]
    %v868 = vld [vmem:[%s864 + $0x18] sm:$0xff]
    %v869 = vld [vmem:[%s864 + $0x20] sm:$0xff]
    %v870 = vld [vmem:[%s864 + $0x28] sm:$0xff]
    %v871 = vld [vmem:[%s864 + $0x30] sm:$0xff]
    %v872 = vld [vmem:[%s864 + $0x38] sm:$0xff]
    %v873 = vld [vmem:[%s864 + $0x40] sm:$0xff]
    %v874 = vld [vmem:[%s864 + $0x48] sm:$0xff]
    %v875 = vld [vmem:[%s864 + $0x50] sm:$0xff]
    %v876 = vld [vmem:[%s864 + $0x58] sm:$0xff]
    %v877 = vld [vmem:[%s864 + $0x60] sm:$0xff]
    %v878 = vld [vmem:[%s864 + $0x68] sm:$0xff]
    %v879 = vld [vmem:[%s864 + $0x70] sm:$0xff]
    %v880 = vld [vmem:[%s864 + $0x78] sm:$0xff]
    %s881 = scalar_lea.vmem [#allocation8], 384
    %v882 = vld [vmem:[%s881] sm:$0xff]
    %v883 = vld [vmem:[%s881 + $0x8] sm:$0xff]
    %v884 = vld [vmem:[%s881 + $0x10] sm:$0xff]
    %v885 = vld [vmem:[%s881 + $0x18] sm:$0xff]
    %v886 = vld [vmem:[%s881 + $0x20] sm:$0xff]
    %v887 = vld [vmem:[%s881 + $0x28] sm:$0xff]
    %v888 = vld [vmem:[%s881 + $0x30] sm:$0xff]
    %v889 = vld [vmem:[%s881 + $0x38] sm:$0xff]
    %v890 = vld [vmem:[%s881 + $0x40] sm:$0xff]
    %v891 = vld [vmem:[%s881 + $0x48] sm:$0xff]
    %v892 = vld [vmem:[%s881 + $0x50] sm:$0xff]
    %v893 = vld [vmem:[%s881 + $0x58] sm:$0xff]
    %v894 = vld [vmem:[%s881 + $0x60] sm:$0xff]
    %v895 = vld [vmem:[%s881 + $0x68] sm:$0xff]
    %v896 = vld [vmem:[%s881 + $0x70] sm:$0xff]
    %v897 = vld [vmem:[%s881 + $0x78] sm:$0xff]
    %v898 = vadd.f32 %v865, %v882
    %v899 = vadd.f32 %v866, %v883
    %v900 = vadd.f32 %v867, %v884
    %v901 = vadd.f32 %v868, %v885
    %v902 = vadd.f32 %v869, %v886
    %v903 = vadd.f32 %v870, %v887
    %v904 = vadd.f32 %v871, %v888
    %v905 = vadd.f32 %v872, %v889
    %v906 = vadd.f32 %v873, %v890
    %v907 = vadd.f32 %v874, %v891
    %v908 = vadd.f32 %v875, %v892
    %v909 = vadd.f32 %v876, %v893
    %v910 = vadd.f32 %v877, %v894
    %v911 = vadd.f32 %v878, %v895
    %v912 = vadd.f32 %v879, %v896
    %v913 = vadd.f32 %v880, %v897
    %914 = vmatprep.subr.mxu0 0.0
    %915 = vmatpush1.msra.mxu0 %v865
    %916 = vmatprep.subr.mxu0 0.0
    %917 = vmatpush1.msra.mxu0 %v866
    %918 = vmatprep.subr.mxu0 0.0
    %919 = vmatpush1.msra.mxu0 %v867
    %920 = vmatprep.subr.mxu0 0.0
    %921 = vmatpush1.msra.mxu0 %v868
    %922 = vmatprep.subr.mxu0 0.0
    %923 = vmatpush1.msra.mxu0 %v869
    %924 = vmatprep.subr.mxu0 0.0
    %925 = vmatpush1.msra.mxu0 %v870
    %926 = vmatprep.subr.mxu0 0.0
    %927 = vmatpush1.msra.mxu0 %v871
    %928 = vmatprep.subr.mxu0 0.0
    %929 = vmatpush1.msra.mxu0 %v872
    %930 = vmatprep.subr.mxu0 0.0
    %931 = vmatpush1.msra.mxu0 %v873
    %932 = vmatprep.subr.mxu0 0.0
    %933 = vmatpush1.msra.mxu0 %v874
    %934 = vmatprep.subr.mxu0 0.0
    %935 = vmatpush1.msra.mxu0 %v875
    %936 = vmatprep.subr.mxu0 0.0
    %937 = vmatpush1.msra.mxu0 %v876
    %938 = vmatprep.subr.mxu0 0.0
    %939 = vmatpush1.msra.mxu0 %v877
    %940 = vmatprep.subr.mxu0 0.0
    %941 = vmatpush1.msra.mxu0 %v878
    %942 = vmatprep.subr.mxu0 0.0
    %943 = vmatpush1.msra.mxu0 %v879
    %944 = vmatprep.subr.mxu0 0.0
    %945 = vmatpush1.msra.mxu0 %v880
    %946 = vmatprep.subr.mxu0 0.0
    %947 = vmatpush1.msra.mxu0 0.0
    %948 = vmatprep.subr.mxu0 0.0
    %949 = vmatpush1.msra.mxu0 0.0
    %950 = vmatprep.subr.mxu0 0.0
    %951 = vmatpush1.msra.mxu0 0.0
    %952 = vmatprep.subr.mxu0 0.0
    %953 = vmatpush1.msra.mxu0 0.0
    %954 = vmatprep.subr.mxu0 0.0
    %955 = vmatpush1.msra.mxu0 0.0
    %956 = vmatprep.subr.mxu0 0.0
    %957 = vmatpush1.msra.mxu0 0.0
    %958 = vmatprep.subr.mxu0 0.0
    %959 = vmatpush1.msra.mxu0 0.0
    %960 = vmatprep.subr.mxu0 0.0
    %961 = vmatpush1.msra.mxu0 0.0
    %962 = vmatprep.subr.mxu0 0.0
    %963 = vmatpush1.msra.mxu0 0.0
    %964 = vmatprep.subr.mxu0 0.0
    %965 = vmatpush1.msra.mxu0 0.0
    %966 = vmatprep.subr.mxu0 0.0
    %967 = vmatpush1.msra.mxu0 0.0
    %968 = vmatprep.subr.mxu0 0.0
    %969 = vmatpush1.msra.mxu0 0.0
    %970 = vmatprep.subr.mxu0 0.0
    %971 = vmatpush1.msra.mxu0 0.0
    %972 = vmatprep.subr.mxu0 0.0
    %973 = vmatpush1.msra.mxu0 0.0
    %974 = vmatprep.subr.mxu0 0.0
    %975 = vmatpush1.msra.mxu0 0.0
    %976 = vmatprep.subr.mxu0 0.0
    %977 = vmatpush1.msra.mxu0 0.0
    %978 = vmatprep.mubr.f32.mxu0 0.0
    %979 = vmatmul.mubr.f32.gmra.mrb[0].mxu0 %v861
    %v980 = vpop.f32.mrb[0].mxu0
    %v981 = vadd.f32 0.0, %v980
    %v982 = vpop.f32.mrb[0].mxu0
    %983 = vdwg.mxu0
    %984 = vmatprep.subr.mxu0 0.0
    %985 = vmatpush1.msra.mxu0 %v882
    %986 = vmatprep.subr.mxu0 0.0
    %987 = vmatpush1.msra.mxu0 %v883
    %988 = vmatprep.subr.mxu0 0.0
    %989 = vmatpush1.msra.mxu0 %v884
    %990 = vmatprep.subr.mxu0 0.0
    %991 = vmatpush1.msra.mxu0 %v885
    %992 = vmatprep.subr.mxu0 0.0
    %993 = vmatpush1.msra.mxu0 %v886
    %994 = vmatprep.subr.mxu0 0.0
    %995 = vmatpush1.msra.mxu0 %v887
    %996 = vmatprep.subr.mxu0 0.0
    %997 = vmatpush1.msra.mxu0 %v888
    %998 = vmatprep.subr.mxu0 0.0
    %999 = vmatpush1.msra.mxu0 %v889
    %1000 = vmatprep.subr.mxu0 0.0
    %1001 = vmatpush1.msra.mxu0 %v890
    %1002 = vmatprep.subr.mxu0 0.0
    %1003 = vmatpush1.msra.mxu0 %v891
    %1004 = vmatprep.subr.mxu0 0.0
    %1005 = vmatpush1.msra.mxu0 %v892
    %1006 = vmatprep.subr.mxu0 0.0
    %1007 = vmatpush1.msra.mxu0 %v893
    %1008 = vmatprep.subr.mxu0 0.0
    %1009 = vmatpush1.msra.mxu0 %v894
    %1010 = vmatprep.subr.mxu0 0.0
    %1011 = vmatpush1.msra.mxu0 %v895
    %1012 = vmatprep.subr.mxu0 0.0
    %1013 = vmatpush1.msra.mxu0 %v896
    %1014 = vmatprep.subr.mxu0 0.0
    %1015 = vmatpush1.msra.mxu0 %v897
    %1016 = vmatprep.subr.mxu0 0.0
    %1017 = vmatpush1.msra.mxu0 0.0
    %1018 = vmatprep.subr.mxu0 0.0
    %1019 = vmatpush1.msra.mxu0 0.0
    %1020 = vmatprep.subr.mxu0 0.0
    %1021 = vmatpush1.msra.mxu0 0.0
    %1022 = vmatprep.subr.mxu0 0.0
    %1023 = vmatpush1.msra.mxu0 0.0
    %1024 = vmatprep.subr.mxu0 0.0
    %1025 = vmatpush1.msra.mxu0 0.0
    %1026 = vmatprep.subr.mxu0 0.0
    %1027 = vmatpush1.msra.mxu0 0.0
    %1028 = vmatprep.subr.mxu0 0.0
    %1029 = vmatpush1.msra.mxu0 0.0
    %1030 = vmatprep.subr.mxu0 0.0
    %1031 = vmatpush1.msra.mxu0 0.0
    %1032 = vmatprep.subr.mxu0 0.0
    %1033 = vmatpush1.msra.mxu0 0.0
    %1034 = vmatprep.subr.mxu0 0.0
    %1035 = vmatpush1.msra.mxu0 0.0
    %1036 = vmatprep.subr.mxu0 0.0
    %1037 = vmatpush1.msra.mxu0 0.0
    %1038 = vmatprep.subr.mxu0 0.0
    %1039 = vmatpush1.msra.mxu0 0.0
    %1040 = vmatprep.subr.mxu0 0.0
    %1041 = vmatpush1.msra.mxu0 0.0
    %1042 = vmatprep.subr.mxu0 0.0
    %1043 = vmatpush1.msra.mxu0 0.0
    %1044 = vmatprep.subr.mxu0 0.0
    %1045 = vmatpush1.msra.mxu0 0.0
    %1046 = vmatprep.subr.mxu0 0.0
    %1047 = vmatpush1.msra.mxu0 0.0
    %1048 = vmatprep.mubr.f32.mxu0 0.0
    %1049 = vmatmul.mubr.f32.gmra.mrb[0].mxu0 %v863
    %v1050 = vpop.f32.mrb[0].mxu0
    %v1051 = vadd.f32 0.0, %v1050
    %v1052 = vpop.f32.mrb[0].mxu0
    %1053 = vdwg.mxu0
    %v1054 = vadd.f32 %v861, %v863
    %1055 = vmatprep.subr.mxu0 0.0
    %1056 = vmatpush1.msra.mxu0 %v898
    %1057 = vmatprep.subr.mxu0 0.0
    %1058 = vmatpush1.msra.mxu0 %v899
    %1059 = vmatprep.subr.mxu0 0.0
    %1060 = vmatpush1.msra.mxu0 %v900
    %1061 = vmatprep.subr.mxu0 0.0
    %1062 = vmatpush1.msra.mxu0 %v901
    %1063 = vmatprep.subr.mxu0 0.0
    %1064 = vmatpush1.msra.mxu0 %v902
    %1065 = vmatprep.subr.mxu0 0.0
    %1066 = vmatpush1.msra.mxu0 %v903
    %1067 = vmatprep.subr.mxu0 0.0
    %1068 = vmatpush1.msra.mxu0 %v904
    %1069 = vmatprep.subr.mxu0 0.0
    %1070 = vmatpush1.msra.mxu0 %v905
    %1071 = vmatprep.subr.mxu0 0.0
    %1072 = vmatpush1.msra.mxu0 %v906
    %1073 = vmatprep.subr.mxu0 0.0
    %1074 = vmatpush1.msra.mxu0 %v907
    %1075 = vmatprep.subr.mxu0 0.0
    %1076 = vmatpush1.msra.mxu0 %v908
    %1077 = vmatprep.subr.mxu0 0.0
    %1078 = vmatpush1.msra.mxu0 %v909
    %1079 = vmatprep.subr.mxu0 0.0
    %1080 = vmatpush1.msra.mxu0 %v910
    %1081 = vmatprep.subr.mxu0 0.0
    %1082 = vmatpush1.msra.mxu0 %v911
    %1083 = vmatprep.subr.mxu0 0.0
    %1084 = vmatpush1.msra.mxu0 %v912
    %1085 = vmatprep.subr.mxu0 0.0
    %1086 = vmatpush1.msra.mxu0 %v913
    %1087 = vmatprep.subr.mxu0 0.0
    %1088 = vmatpush1.msra.mxu0 0.0
    %1089 = vmatprep.subr.mxu0 0.0
    %1090 = vmatpush1.msra.mxu0 0.0
    %1091 = vmatprep.subr.mxu0 0.0
    %1092 = vmatpush1.msra.mxu0 0.0
    %1093 = vmatprep.subr.mxu0 0.0
    %1094 = vmatpush1.msra.mxu0 0.0
    %1095 = vmatprep.subr.mxu0 0.0
    %1096 = vmatpush1.msra.mxu0 0.0
    %1097 = vmatprep.subr.mxu0 0.0
    %1098 = vmatpush1.msra.mxu0 0.0
    %1099 = vmatprep.subr.mxu0 0.0
    %1100 = vmatpush1.msra.mxu0 0.0
    %1101 = vmatprep.subr.mxu0 0.0
    %1102 = vmatpush1.msra.mxu0 0.0
    %1103 = vmatprep.subr.mxu0 0.0
    %1104 = vmatpush1.msra.mxu0 0.0
    %1105 = vmatprep.subr.mxu0 0.0
    %1106 = vmatpush1.msra.mxu0 0.0
    %1107 = vmatprep.subr.mxu0 0.0
    %1108 = vmatpush1.msra.mxu0 0.0
    %1109 = vmatprep.subr.mxu0 0.0
    %1110 = vmatpush1.msra.mxu0 0.0
    %1111 = vmatprep.subr.mxu0 0.0
    %1112 = vmatpush1.msra.mxu0 0.0
    %1113 = vmatprep.subr.mxu0 0.0
    %1114 = vmatpush1.msra.mxu0 0.0
    %1115 = vmatprep.subr.mxu0 0.0
    %1116 = vmatpush1.msra.mxu0 0.0
    %1117 = vmatprep.subr.mxu0 0.0
    %1118 = vmatpush1.msra.mxu0 0.0
    %1119 = vmatprep.mubr.f32.mxu0 0.0
    %1120 = vmatmul.mubr.f32.gmra.mrb[0].mxu0 %v1054
    %v1121 = vpop.f32.mrb[0].mxu0
    %v1122 = vadd.f32 0.0, %v1121
    %v1123 = vpop.f32.mrb[0].mxu0
    %1124 = vdwg.mxu0
    %v1125 = vsub.f32 %v981, %v1051
    %v1126 = vsub.f32 %v1122, %v981
    %v1127 = vsub.f32 %v1126, %v1051
    %s1128 = scalar_lea.vmem [#allocation7], 512
    %v1129 = vld [vmem:[%s1128] sm:$0xff]
    %v1130 = vld [vmem:[%s1128 + $0x8] sm:$0xff]
    %v1131 = vld [vmem:[%s1128 + $0x10] sm:$0xff]
    %v1132 = vld [vmem:[%s1128 + $0x18] sm:$0xff]
    %v1133 = vld [vmem:[%s1128 + $0x20] sm:$0xff]
    %v1134 = vld [vmem:[%s1128 + $0x28] sm:$0xff]
    %v1135 = vld [vmem:[%s1128 + $0x30] sm:$0xff]
    %v1136 = vld [vmem:[%s1128 + $0x38] sm:$0xff]
    %v1137 = vld [vmem:[%s1128 + $0x40] sm:$0xff]
    %v1138 = vld [vmem:[%s1128 + $0x48] sm:$0xff]
    %v1139 = vld [vmem:[%s1128 + $0x50] sm:$0xff]
    %v1140 = vld [vmem:[%s1128 + $0x58] sm:$0xff]
    %v1141 = vld [vmem:[%s1128 + $0x60] sm:$0xff]
    %v1142 = vld [vmem:[%s1128 + $0x68] sm:$0xff]
    %v1143 = vld [vmem:[%s1128 + $0x70] sm:$0xff]
    %v1144 = vld [vmem:[%s1128 + $0x78] sm:$0xff]
    %s1145 = scalar_lea.vmem [#allocation8], 512
    %v1146 = vld [vmem:[%s1145] sm:$0xff]
    %v1147 = vld [vmem:[%s1145 + $0x8] sm:$0xff]
    %v1148 = vld [vmem:[%s1145 + $0x10] sm:$0xff]
    %v1149 = vld [vmem:[%s1145 + $0x18] sm:$0xff]
    %v1150 = vld [vmem:[%s1145 + $0x20] sm:$0xff]
    %v1151 = vld [vmem:[%s1145 + $0x28] sm:$0xff]
    %v1152 = vld [vmem:[%s1145 + $0x30] sm:$0xff]
    %v1153 = vld [vmem:[%s1145 + $0x38] sm:$0xff]
    %v1154 = vld [vmem:[%s1145 + $0x40] sm:$0xff]
    %v1155 = vld [vmem:[%s1145 + $0x48] sm:$0xff]
    %v1156 = vld [vmem:[%s1145 + $0x50] sm:$0xff]
    %v1157 = vld [vmem:[%s1145 + $0x58] sm:$0xff]
    %v1158 = vld [vmem:[%s1145 + $0x60] sm:$0xff]
    %v1159 = vld [vmem:[%s1145 + $0x68] sm:$0xff]
    %v1160 = vld [vmem:[%s1145 + $0x70] sm:$0xff]
    %v1161 = vld [vmem:[%s1145 + $0x78] sm:$0xff]
    %v1162 = vadd.f32 %v1129, %v1146
    %v1163 = vadd.f32 %v1130, %v1147
    %v1164 = vadd.f32 %v1131, %v1148
    %v1165 = vadd.f32 %v1132, %v1149
    %v1166 = vadd.f32 %v1133, %v1150
    %v1167 = vadd.f32 %v1134, %v1151
    %v1168 = vadd.f32 %v1135, %v1152
    %v1169 = vadd.f32 %v1136, %v1153
    %v1170 = vadd.f32 %v1137, %v1154
    %v1171 = vadd.f32 %v1138, %v1155
    %v1172 = vadd.f32 %v1139, %v1156
    %v1173 = vadd.f32 %v1140, %v1157
    %v1174 = vadd.f32 %v1141, %v1158
    %v1175 = vadd.f32 %v1142, %v1159
    %v1176 = vadd.f32 %v1143, %v1160
    %v1177 = vadd.f32 %v1144, %v1161
    %1178 = vmatprep.subr.mxu0 0.0
    %1179 = vmatpush1.msra.mxu0 %v1129
    %1180 = vmatprep.subr.mxu0 0.0
    %1181 = vmatpush1.msra.mxu0 %v1130
    %1182 = vmatprep.subr.mxu0 0.0
    %1183 = vmatpush1.msra.mxu0 %v1131
    %1184 = vmatprep.subr.mxu0 0.0
    %1185 = vmatpush1.msra.mxu0 %v1132
    %1186 = vmatprep.subr.mxu0 0.0
    %1187 = vmatpush1.msra.mxu0 %v1133
    %1188 = vmatprep.subr.mxu0 0.0
    %1189 = vmatpush1.msra.mxu0 %v1134
    %1190 = vmatprep.subr.mxu0 0.0
    %1191 = vmatpush1.msra.mxu0 %v1135
    %1192 = vmatprep.subr.mxu0 0.0
    %1193 = vmatpush1.msra.mxu0 %v1136
    %1194 = vmatprep.subr.mxu0 0.0
    %1195 = vmatpush1.msra.mxu0 %v1137
    %1196 = vmatprep.subr.mxu0 0.0
    %1197 = vmatpush1.msra.mxu0 %v1138
    %1198 = vmatprep.subr.mxu0 0.0
    %1199 = vmatpush1.msra.mxu0 %v1139
    %1200 = vmatprep.subr.mxu0 0.0
    %1201 = vmatpush1.msra.mxu0 %v1140
    %1202 = vmatprep.subr.mxu0 0.0
    %1203 = vmatpush1.msra.mxu0 %v1141
    %1204 = vmatprep.subr.mxu0 0.0
    %1205 = vmatpush1.msra.mxu0 %v1142
    %1206 = vmatprep.subr.mxu0 0.0
    %1207 = vmatpush1.msra.mxu0 %v1143
    %1208 = vmatprep.subr.mxu0 0.0
    %1209 = vmatpush1.msra.mxu0 %v1144
    %1210 = vmatprep.subr.mxu0 0.0
    %1211 = vmatpush1.msra.mxu0 0.0
    %1212 = vmatprep.subr.mxu0 0.0
    %1213 = vmatpush1.msra.mxu0 0.0
    %1214 = vmatprep.subr.mxu0 0.0
    %1215 = vmatpush1.msra.mxu0 0.0
    %1216 = vmatprep.subr.mxu0 0.0
    %1217 = vmatpush1.msra.mxu0 0.0
    %1218 = vmatprep.subr.mxu0 0.0
    %1219 = vmatpush1.msra.mxu0 0.0
    %1220 = vmatprep.subr.mxu0 0.0
    %1221 = vmatpush1.msra.mxu0 0.0
    %1222 = vmatprep.subr.mxu0 0.0
    %1223 = vmatpush1.msra.mxu0 0.0
    %1224 = vmatprep.subr.mxu0 0.0
    %1225 = vmatpush1.msra.mxu0 0.0
    %1226 = vmatprep.subr.mxu0 0.0
    %1227 = vmatpush1.msra.mxu0 0.0
    %1228 = vmatprep.subr.mxu0 0.0
    %1229 = vmatpush1.msra.mxu0 0.0
    %1230 = vmatprep.subr.mxu0 0.0
    %1231 = vmatpush1.msra.mxu0 0.0
    %1232 = vmatprep.subr.mxu0 0.0
    %1233 = vmatpush1.msra.mxu0 0.0
    %1234 = vmatprep.subr.mxu0 0.0
    %1235 = vmatpush1.msra.mxu0 0.0
    %1236 = vmatprep.subr.mxu0 0.0
    %1237 = vmatpush1.msra.mxu0 0.0
    %1238 = vmatprep.subr.mxu0 0.0
    %1239 = vmatpush1.msra.mxu0 0.0
    %1240 = vmatprep.subr.mxu0 0.0
    %1241 = vmatpush1.msra.mxu0 0.0
    %1242 = vmatprep.mubr.f32.mxu0 0.0
    %1243 = vmatmul.mubr.f32.gmra.mrb[0].mxu0 %v1125
    %v1244 = vpop.f32.mrb[0].mxu0
    %v1245 = vadd.f32 0.0, %v1244
    %v1246 = vpop.f32.mrb[0].mxu0
    %1247 = vdwg.mxu0
    %1248 = vmatprep.subr.mxu0 0.0
    %1249 = vmatpush1.msra.mxu0 %v1146
    %1250 = vmatprep.subr.mxu0 0.0
    %1251 = vmatpush1.msra.mxu0 %v1147
    %1252 = vmatprep.subr.mxu0 0.0
    %1253 = vmatpush1.msra.mxu0 %v1148
    %1254 = vmatprep.subr.mxu0 0.0
    %1255 = vmatpush1.msra.mxu0 %v1149
    %1256 = vmatprep.subr.mxu0 0.0
    %1257 = vmatpush1.msra.mxu0 %v1150
    %1258 = vmatprep.subr.mxu0 0.0
    %1259 = vmatpush1.msra.mxu0 %v1151
    %1260 = vmatprep.subr.mxu0 0.0
    %1261 = vmatpush1.msra.mxu0 %v1152
    %1262 = vmatprep.subr.mxu0 0.0
    %1263 = vmatpush1.msra.mxu0 %v1153
    %1264 = vmatprep.subr.mxu0 0.0
    %1265 = vmatpush1.msra.mxu0 %v1154
    %1266 = vmatprep.subr.mxu0 0.0
    %1267 = vmatpush1.msra.mxu0 %v1155
    %1268 = vmatprep.subr.mxu0 0.0
    %1269 = vmatpush1.msra.mxu0 %v1156
    %1270 = vmatprep.subr.mxu0 0.0
    %1271 = vmatpush1.msra.mxu0 %v1157
    %1272 = vmatprep.subr.mxu0 0.0
    %1273 = vmatpush1.msra.mxu0 %v1158
    %1274 = vmatprep.subr.mxu0 0.0
    %1275 = vmatpush1.msra.mxu0 %v1159
    %1276 = vmatprep.subr.mxu0 0.0
    %1277 = vmatpush1.msra.mxu0 %v1160
    %1278 = vmatprep.subr.mxu0 0.0
    %1279 = vmatpush1.msra.mxu0 %v1161
    %1280 = vmatprep.subr.mxu0 0.0
    %1281 = vmatpush1.msra.mxu0 0.0
    %1282 = vmatprep.subr.mxu0 0.0
    %1283 = vmatpush1.msra.mxu0 0.0
    %1284 = vmatprep.subr.mxu0 0.0
    %1285 = vmatpush1.msra.mxu0 0.0
    %1286 = vmatprep.subr.mxu0 0.0
    %1287 = vmatpush1.msra.mxu0 0.0
    %1288 = vmatprep.subr.mxu0 0.0
    %1289 = vmatpush1.msra.mxu0 0.0
    %1290 = vmatprep.subr.mxu0 0.0
    %1291 = vmatpush1.msra.mxu0 0.0
    %1292 = vmatprep.subr.mxu0 0.0
    %1293 = vmatpush1.msra.mxu0 0.0
    %1294 = vmatprep.subr.mxu0 0.0
    %1295 = vmatpush1.msra.mxu0 0.0
    %1296 = vmatprep.subr.mxu0 0.0
    %1297 = vmatpush1.msra.mxu0 0.0
    %1298 = vmatprep.subr.mxu0 0.0
    %1299 = vmatpush1.msra.mxu0 0.0
    %1300 = vmatprep.subr.mxu0 0.0
    %1301 = vmatpush1.msra.mxu0 0.0
    %1302 = vmatprep.subr.mxu0 0.0
    %1303 = vmatpush1.msra.mxu0 0.0
    %1304 = vmatprep.subr.mxu0 0.0
    %1305 = vmatpush1.msra.mxu0 0.0
    %1306 = vmatprep.subr.mxu0 0.0
    %1307 = vmatpush1.msra.mxu0 0.0
    %1308 = vmatprep.subr.mxu0 0.0
    %1309 = vmatpush1.msra.mxu0 0.0
    %1310 = vmatprep.subr.mxu0 0.0
    %1311 = vmatpush1.msra.mxu0 0.0
    %1312 = vmatprep.mubr.f32.mxu0 0.0
    %1313 = vmatmul.mubr.f32.gmra.mrb[0].mxu0 %v1127
    %v1314 = vpop.f32.mrb[0].mxu0
    %v1315 = vadd.f32 0.0, %v1314
    %v1316 = vpop.f32.mrb[0].mxu0
    %1317 = vdwg.mxu0
    %v1318 = vadd.f32 %v1125, %v1127
    %1319 = vmatprep.subr.mxu0 0.0
    %1320 = vmatpush1.msra.mxu0 %v1162
    %1321 = vmatprep.subr.mxu0 0.0
    %1322 = vmatpush1.msra.mxu0 %v1163
    %1323 = vmatprep.subr.mxu0 0.0
    %1324 = vmatpush1.msra.mxu0 %v1164
    %1325 = vmatprep.subr.mxu0 0.0
    %1326 = vmatpush1.msra.mxu0 %v1165
    %1327 = vmatprep.subr.mxu0 0.0
    %1328 = vmatpush1.msra.mxu0 %v1166
    %1329 = vmatprep.subr.mxu0 0.0
    %1330 = vmatpush1.msra.mxu0 %v1167
    %1331 = vmatprep.subr.mxu0 0.0
    %1332 = vmatpush1.msra.mxu0 %v1168
    %1333 = vmatprep.subr.mxu0 0.0
    %1334 = vmatpush1.msra.mxu0 %v1169
    %1335 = vmatprep.subr.mxu0 0.0
    %1336 = vmatpush1.msra.mxu0 %v1170
    %1337 = vmatprep.subr.mxu0 0.0
    %1338 = vmatpush1.msra.mxu0 %v1171
    %1339 = vmatprep.subr.mxu0 0.0
    %1340 = vmatpush1.msra.mxu0 %v1172
    %1341 = vmatprep.subr.mxu0 0.0
    %1342 = vmatpush1.msra.mxu0 %v1173
    %1343 = vmatprep.subr.mxu0 0.0
    %1344 = vmatpush1.msra.mxu0 %v1174
    %1345 = vmatprep.subr.mxu0 0.0
    %1346 = vmatpush1.msra.mxu0 %v1175
    %1347 = vmatprep.subr.mxu0 0.0
    %1348 = vmatpush1.msra.mxu0 %v1176
    %1349 = vmatprep.subr.mxu0 0.0
    %1350 = vmatpush1.msra.mxu0 %v1177
    %1351 = vmatprep.subr.mxu0 0.0
    %1352 = vmatpush1.msra.mxu0 0.0
    %1353 = vmatprep.subr.mxu0 0.0
    %1354 = vmatpush1.msra.mxu0 0.0
    %1355 = vmatprep.subr.mxu0 0.0
    %1356 = vmatpush1.msra.mxu0 0.0
    %1357 = vmatprep.subr.mxu0 0.0
    %1358 = vmatpush1.msra.mxu0 0.0
    %1359 = vmatprep.subr.mxu0 0.0
    %1360 = vmatpush1.msra.mxu0 0.0
    %1361 = vmatprep.subr.mxu0 0.0
    %1362 = vmatpush1.msra.mxu0 0.0
    %1363 = vmatprep.subr.mxu0 0.0
    %1364 = vmatpush1.msra.mxu0 0.0
    %1365 = vmatprep.subr.mxu0 0.0
    %1366 = vmatpush1.msra.mxu0 0.0
    %1367 = vmatprep.subr.mxu0 0.0
    %1368 = vmatpush1.msra.mxu0 0.0
    %1369 = vmatprep.subr.mxu0 0.0
    %1370 = vmatpush1.msra.mxu0 0.0
    %1371 = vmatprep.subr.mxu0 0.0
    %1372 = vmatpush1.msra.mxu0 0.0
    %1373 = vmatprep.subr.mxu0 0.0
    %1374 = vmatpush1.msra.mxu0 0.0
    %1375 = vmatprep.subr.mxu0 0.0
    %1376 = vmatpush1.msra.mxu0 0.0
    %1377 = vmatprep.subr.mxu0 0.0
    %1378 = vmatpush1.msra.mxu0 0.0
    %1379 = vmatprep.subr.mxu0 0.0
    %1380 = vmatpush1.msra.mxu0 0.0
    %1381 = vmatprep.subr.mxu0 0.0
    %1382 = vmatpush1.msra.mxu0 0.0
    %1383 = vmatprep.mubr.f32.mxu0 0.0
    %1384 = vmatmul.mubr.f32.gmra.mrb[0].mxu0 %v1318
    %v1385 = vpop.f32.mrb[0].mxu0
    %v1386 = vadd.f32 0.0, %v1385
    %v1387 = vpop.f32.mrb[0].mxu0
    %1388 = vdwg.mxu0
    %v1389 = vsub.f32 %v1245, %v1315
    %v1390 = vsub.f32 %v1386, %v1245
    %v1391 = vsub.f32 %v1390, %v1315
    %s1392 = scalar_lea.vmem [#allocation7], 640
    %v1393 = vld [vmem:[%s1392] sm:$0xff]
    %v1394 = vld [vmem:[%s1392 + $0x8] sm:$0xff]
    %v1395 = vld [vmem:[%s1392 + $0x10] sm:$0xff]
    %v1396 = vld [vmem:[%s1392 + $0x18] sm:$0xff]
    %v1397 = vld [vmem:[%s1392 + $0x20] sm:$0xff]
    %v1398 = vld [vmem:[%s1392 + $0x28] sm:$0xff]
    %v1399 = vld [vmem:[%s1392 + $0x30] sm:$0xff]
    %v1400 = vld [vmem:[%s1392 + $0x38] sm:$0xff]
    %v1401 = vld [vmem:[%s1392 + $0x40] sm:$0xff]
    %v1402 = vld [vmem:[%s1392 + $0x48] sm:$0xff]
    %v1403 = vld [vmem:[%s1392 + $0x50] sm:$0xff]
    %v1404 = vld [vmem:[%s1392 + $0x58] sm:$0xff]
    %v1405 = vld [vmem:[%s1392 + $0x60] sm:$0xff]
    %v1406 = vld [vmem:[%s1392 + $0x68] sm:$0xff]
    %v1407 = vld [vmem:[%s1392 + $0x70] sm:$0xff]
    %v1408 = vld [vmem:[%s1392 + $0x78] sm:$0xff]
    %s1409 = scalar_lea.vmem [#allocation8], 640
    %v1410 = vld [vmem:[%s1409] sm:$0xff]
    %v1411 = vld [vmem:[%s1409 + $0x8] sm:$0xff]
    %v1412 = vld [vmem:[%s1409 + $0x10] sm:$0xff]
    %v1413 = vld [vmem:[%s1409 + $0x18] sm:$0xff]
    %v1414 = vld [vmem:[%s1409 + $0x20] sm:$0xff]
    %v1415 = vld [vmem:[%s1409 + $0x28] sm:$0xff]
    %v1416 = vld [vmem:[%s1409 + $0x30] sm:$0xff]
    %v1417 = vld [vmem:[%s1409 + $0x38] sm:$0xff]
    %v1418 = vld [vmem:[%s1409 + $0x40] sm:$0xff]
    %v1419 = vld [vmem:[%s1409 + $0x48] sm:$0xff]
    %v1420 = vld [vmem:[%s1409 + $0x50] sm:$0xff]
    %v1421 = vld [vmem:[%s1409 + $0x58] sm:$0xff]
    %v1422 = vld [vmem:[%s1409 + $0x60] sm:$0xff]
    %v1423 = vld [vmem:[%s1409 + $0x68] sm:$0xff]
    %v1424 = vld [vmem:[%s1409 + $0x70] sm:$0xff]
    %v1425 = vld [vmem:[%s1409 + $0x78] sm:$0xff]
    %v1426 = vadd.f32 %v1393, %v1410
    %v1427 = vadd.f32 %v1394, %v1411
    %v1428 = vadd.f32 %v1395, %v1412
    %v1429 = vadd.f32 %v1396, %v1413
    %v1430 = vadd.f32 %v1397, %v1414
    %v1431 = vadd.f32 %v1398, %v1415
    %v1432 = vadd.f32 %v1399, %v1416
    %v1433 = vadd.f32 %v1400, %v1417
    %v1434 = vadd.f32 %v1401, %v1418
    %v1435 = vadd.f32 %v1402, %v1419
    %v1436 = vadd.f32 %v1403, %v1420
    %v1437 = vadd.f32 %v1404, %v1421
    %v1438 = vadd.f32 %v1405, %v1422
    %v1439 = vadd.f32 %v1406, %v1423
    %v1440 = vadd.f32 %v1407, %v1424
    %v1441 = vadd.f32 %v1408, %v1425
    %1442 = vmatprep.subr.mxu0 0.0
    %1443 = vmatpush1.msra.mxu0 %v1393
    %1444 = vmatprep.subr.mxu0 0.0
    %1445 = vmatpush1.msra.mxu0 %v1394
    %1446 = vmatprep.subr.mxu0 0.0
    %1447 = vmatpush1.msra.mxu0 %v1395
    %1448 = vmatprep.subr.mxu0 0.0
    %1449 = vmatpush1.msra.mxu0 %v1396
    %1450 = vmatprep.subr.mxu0 0.0
    %1451 = vmatpush1.msra.mxu0 %v1397
    %1452 = vmatprep.subr.mxu0 0.0
    %1453 = vmatpush1.msra.mxu0 %v1398
    %1454 = vmatprep.subr.mxu0 0.0
    %1455 = vmatpush1.msra.mxu0 %v1399
    %1456 = vmatprep.subr.mxu0 0.0
    %1457 = vmatpush1.msra.mxu0 %v1400
    %1458 = vmatprep.subr.mxu0 0.0
    %1459 = vmatpush1.msra.mxu0 %v1401
    %1460 = vmatprep.subr.mxu0 0.0
    %1461 = vmatpush1.msra.mxu0 %v1402
    %1462 = vmatprep.subr.mxu0 0.0
    %1463 = vmatpush1.msra.mxu0 %v1403
    %1464 = vmatprep.subr.mxu0 0.0
    %1465 = vmatpush1.msra.mxu0 %v1404
    %1466 = vmatprep.subr.mxu0 0.0
    %1467 = vmatpush1.msra.mxu0 %v1405
    %1468 = vmatprep.subr.mxu0 0.0
    %1469 = vmatpush1.msra.mxu0 %v1406
    %1470 = vmatprep.subr.mxu0 0.0
    %1471 = vmatpush1.msra.mxu0 %v1407
    %1472 = vmatprep.subr.mxu0 0.0
    %1473 = vmatpush1.msra.mxu0 %v1408
    %1474 = vmatprep.subr.mxu0 0.0
    %1475 = vmatpush1.msra.mxu0 0.0
    %1476 = vmatprep.subr.mxu0 0.0
    %1477 = vmatpush1.msra.mxu0 0.0
    %1478 = vmatprep.subr.mxu0 0.0
    %1479 = vmatpush1.msra.mxu0 0.0
    %1480 = vmatprep.subr.mxu0 0.0
    %1481 = vmatpush1.msra.mxu0 0.0
    %1482 = vmatprep.subr.mxu0 0.0
    %1483 = vmatpush1.msra.mxu0 0.0
    %1484 = vmatprep.subr.mxu0 0.0
    %1485 = vmatpush1.msra.mxu0 0.0
    %1486 = vmatprep.subr.mxu0 0.0
    %1487 = vmatpush1.msra.mxu0 0.0
    %1488 = vmatprep.subr.mxu0 0.0
    %1489 = vmatpush1.msra.mxu0 0.0
    %1490 = vmatprep.subr.mxu0 0.0
    %1491 = vmatpush1.msra.mxu0 0.0
    %1492 = vmatprep.subr.mxu0 0.0
    %1493 = vmatpush1.msra.mxu0 0.0
    %1494 = vmatprep.subr.mxu0 0.0
    %1495 = vmatpush1.msra.mxu0 0.0
    %1496 = vmatprep.subr.mxu0 0.0
    %1497 = vmatpush1.msra.mxu0 0.0
    %1498 = vmatprep.subr.mxu0 0.0
    %1499 = vmatpush1.msra.mxu0 0.0
    %1500 = vmatprep.subr.mxu0 0.0
    %1501 = vmatpush1.msra.mxu0 0.0
    %1502 = vmatprep.subr.mxu0 0.0
    %1503 = vmatpush1.msra.mxu0 0.0
    %1504 = vmatprep.subr.mxu0 0.0
    %1505 = vmatpush1.msra.mxu0 0.0
    %1506 = vmatprep.mubr.f32.mxu0 0.0
    %1507 = vmatmul.mubr.f32.gmra.mrb[0].mxu0 %v1389
    %v1508 = vpop.f32.mrb[0].mxu0
    %v1509 = vadd.f32 0.0, %v1508
    %v1510 = vpop.f32.mrb[0].mxu0
    %1511 = vdwg.mxu0
    %1512 = vmatprep.subr.mxu0 0.0
    %1513 = vmatpush1.msra.mxu0 %v1410
    %1514 = vmatprep.subr.mxu0 0.0
    %1515 = vmatpush1.msra.mxu0 %v1411
    %1516 = vmatprep.subr.mxu0 0.0
    %1517 = vmatpush1.msra.mxu0 %v1412
    %1518 = vmatprep.subr.mxu0 0.0
    %1519 = vmatpush1.msra.mxu0 %v1413
    %1520 = vmatprep.subr.mxu0 0.0
    %1521 = vmatpush1.msra.mxu0 %v1414
    %1522 = vmatprep.subr.mxu0 0.0
    %1523 = vmatpush1.msra.mxu0 %v1415
    %1524 = vmatprep.subr.mxu0 0.0
    %1525 = vmatpush1.msra.mxu0 %v1416
    %1526 = vmatprep.subr.mxu0 0.0
    %1527 = vmatpush1.msra.mxu0 %v1417
    %1528 = vmatprep.subr.mxu0 0.0
    %1529 = vmatpush1.msra.mxu0 %v1418
    %1530 = vmatprep.subr.mxu0 0.0
    %1531 = vmatpush1.msra.mxu0 %v1419
    %1532 = vmatprep.subr.mxu0 0.0
    %1533 = vmatpush1.msra.mxu0 %v1420
    %1534 = vmatprep.subr.mxu0 0.0
    %1535 = vmatpush1.msra.mxu0 %v1421
    %1536 = vmatprep.subr.mxu0 0.0
    %1537 = vmatpush1.msra.mxu0 %v1422
    %1538 = vmatprep.subr.mxu0 0.0
    %1539 = vmatpush1.msra.mxu0 %v1423
    %1540 = vmatprep.subr.mxu0 0.0
    %1541 = vmatpush1.msra.mxu0 %v1424
    %1542 = vmatprep.subr.mxu0 0.0
    %1543 = vmatpush1.msra.mxu0 %v1425
    %1544 = vmatprep.subr.mxu0 0.0
    %1545 = vmatpush1.msra.mxu0 0.0
    %1546 = vmatprep.subr.mxu0 0.0
    %1547 = vmatpush1.msra.mxu0 0.0
    %1548 = vmatprep.subr.mxu0 0.0
    %1549 = vmatpush1.msra.mxu0 0.0
    %1550 = vmatprep.subr.mxu0 0.0
    %1551 = vmatpush1.msra.mxu0 0.0
    %1552 = vmatprep.subr.mxu0 0.0
    %1553 = vmatpush1.msra.mxu0 0.0
    %1554 = vmatprep.subr.mxu0 0.0
    %1555 = vmatpush1.msra.mxu0 0.0
    %1556 = vmatprep.subr.mxu0 0.0
    %1557 = vmatpush1.msra.mxu0 0.0
    %1558 = vmatprep.subr.mxu0 0.0
    %1559 = vmatpush1.msra.mxu0 0.0
    %1560 = vmatprep.subr.mxu0 0.0
    %1561 = vmatpush1.msra.mxu0 0.0
    %1562 = vmatprep.subr.mxu0 0.0
    %1563 = vmatpush1.msra.mxu0 0.0
    %1564 = vmatprep.subr.mxu0 0.0
    %1565 = vmatpush1.msra.mxu0 0.0
    %1566 = vmatprep.subr.mxu0 0.0
    %1567 = vmatpush1.msra.mxu0 0.0
    %1568 = vmatprep.subr.mxu0 0.0
    %1569 = vmatpush1.msra.mxu0 0.0
    %1570 = vmatprep.subr.mxu0 0.0
    %1571 = vmatpush1.msra.mxu0 0.0
    %1572 = vmatprep.subr.mxu0 0.0
    %1573 = vmatpush1.msra.mxu0 0.0
    %1574 = vmatprep.subr.mxu0 0.0
    %1575 = vmatpush1.msra.mxu0 0.0
    %1576 = vmatprep.mubr.f32.mxu0 0.0
    %1577 = vmatmul.mubr.f32.gmra.mrb[0].mxu0 %v1391
    %v1578 = vpop.f32.mrb[0].mxu0
    %v1579 = vadd.f32 0.0, %v1578
    %v1580 = vpop.f32.mrb[0].mxu0
    %1581 = vdwg.mxu0
    %v1582 = vadd.f32 %v1389, %v1391
    %1583 = vmatprep.subr.mxu0 0.0
    %1584 = vmatpush1.msra.mxu0 %v1426
    %1585 = vmatprep.subr.mxu0 0.0
    %1586 = vmatpush1.msra.mxu0 %v1427
    %1587 = vmatprep.subr.mxu0 0.0
    %1588 = vmatpush1.msra.mxu0 %v1428
    %1589 = vmatprep.subr.mxu0 0.0
    %1590 = vmatpush1.msra.mxu0 %v1429
    %1591 = vmatprep.subr.mxu0 0.0
    %1592 = vmatpush1.msra.mxu0 %v1430
    %1593 = vmatprep.subr.mxu0 0.0
    %1594 = vmatpush1.msra.mxu0 %v1431
    %1595 = vmatprep.subr.mxu0 0.0
    %1596 = vmatpush1.msra.mxu0 %v1432
    %1597 = vmatprep.subr.mxu0 0.0
    %1598 = vmatpush1.msra.mxu0 %v1433
    %1599 = vmatprep.subr.mxu0 0.0
    %1600 = vmatpush1.msra.mxu0 %v1434
    %1601 = vmatprep.subr.mxu0 0.0
    %1602 = vmatpush1.msra.mxu0 %v1435
    %1603 = vmatprep.subr.mxu0 0.0
    %1604 = vmatpush1.msra.mxu0 %v1436
    %1605 = vmatprep.subr.mxu0 0.0
    %1606 = vmatpush1.msra.mxu0 %v1437
    %1607 = vmatprep.subr.mxu0 0.0
    %1608 = vmatpush1.msra.mxu0 %v1438
    %1609 = vmatprep.subr.mxu0 0.0
    %1610 = vmatpush1.msra.mxu0 %v1439
    %1611 = vmatprep.subr.mxu0 0.0
    %1612 = vmatpush1.msra.mxu0 %v1440
    %1613 = vmatprep.subr.mxu0 0.0
    %1614 = vmatpush1.msra.mxu0 %v1441
    %1615 = vmatprep.subr.mxu0 0.0
    %1616 = vmatpush1.msra.mxu0 0.0
    %1617 = vmatprep.subr.mxu0 0.0
    %1618 = vmatpush1.msra.mxu0 0.0
    %1619 = vmatprep.subr.mxu0 0.0
    %1620 = vmatpush1.msra.mxu0 0.0
    %1621 = vmatprep.subr.mxu0 0.0
    %1622 = vmatpush1.msra.mxu0 0.0
    %1623 = vmatprep.subr.mxu0 0.0
    %1624 = vmatpush1.msra.mxu0 0.0
    %1625 = vmatprep.subr.mxu0 0.0
    %1626 = vmatpush1.msra.mxu0 0.0
    %1627 = vmatprep.subr.mxu0 0.0
    %1628 = vmatpush1.msra.mxu0 0.0
    %1629 = vmatprep.subr.mxu0 0.0
    %1630 = vmatpush1.msra.mxu0 0.0
    %1631 = vmatprep.subr.mxu0 0.0
    %1632 = vmatpush1.msra.mxu0 0.0
    %1633 = vmatprep.subr.mxu0 0.0
    %1634 = vmatpush1.msra.mxu0 0.0
    %1635 = vmatprep.subr.mxu0 0.0
    %1636 = vmatpush1.msra.mxu0 0.0
    %1637 = vmatprep.subr.mxu0 0.0
    %1638 = vmatpush1.msra.mxu0 0.0
    %1639 = vmatprep.subr.mxu0 0.0
    %1640 = vmatpush1.msra.mxu0 0.0
    %1641 = vmatprep.subr.mxu0 0.0
    %1642 = vmatpush1.msra.mxu0 0.0
    %1643 = vmatprep.subr.mxu0 0.0
    %1644 = vmatpush1.msra.mxu0 0.0
    %1645 = vmatprep.subr.mxu0 0.0
    %1646 = vmatpush1.msra.mxu0 0.0
    %1647 = vmatprep.mubr.f32.mxu0 0.0
    %1648 = vmatmul.mubr.f32.gmra.mrb[0].mxu0 %v1582
    %v1649 = vpop.f32.mrb[0].mxu0
    %v1650 = vadd.f32 0.0, %v1649
    %v1651 = vpop.f32.mrb[0].mxu0
    %1652 = vdwg.mxu0
    %v1653 = vsub.f32 %v1509, %v1579
    %v1654 = vsub.f32 %v1650, %v1509
    %v1655 = vsub.f32 %v1654, %v1579
    %s1656 = scalar_lea.vmem [#allocation7], 768
    %v1657 = vld [vmem:[%s1656] sm:$0xff]
    %v1658 = vld [vmem:[%s1656 + $0x8] sm:$0xff]
    %v1659 = vld [vmem:[%s1656 + $0x10] sm:$0xff]
    %v1660 = vld [vmem:[%s1656 + $0x18] sm:$0xff]
    %v1661 = vld [vmem:[%s1656 + $0x20] sm:$0xff]
    %v1662 = vld [vmem:[%s1656 + $0x28] sm:$0xff]
    %v1663 = vld [vmem:[%s1656 + $0x30] sm:$0xff]
    %v1664 = vld [vmem:[%s1656 + $0x38] sm:$0xff]
    %v1665 = vld [vmem:[%s1656 + $0x40] sm:$0xff]
    %v1666 = vld [vmem:[%s1656 + $0x48] sm:$0xff]
    %v1667 = vld [vmem:[%s1656 + $0x50] sm:$0xff]
    %v1668 = vld [vmem:[%s1656 + $0x58] sm:$0xff]
    %v1669 = vld [vmem:[%s1656 + $0x60] sm:$0xff]
    %v1670 = vld [vmem:[%s1656 + $0x68] sm:$0xff]
    %v1671 = vld [vmem:[%s1656 + $0x70] sm:$0xff]
    %v1672 = vld [vmem:[%s1656 + $0x78] sm:$0xff]
    %s1673 = scalar_lea.vmem [#allocation8], 768
    %v1674 = vld [vmem:[%s1673] sm:$0xff]
    %v1675 = vld [vmem:[%s1673 + $0x8] sm:$0xff]
    %v1676 = vld [vmem:[%s1673 + $0x10] sm:$0xff]
    %v1677 = vld [vmem:[%s1673 + $0x18] sm:$0xff]
    %v1678 = vld [vmem:[%s1673 + $0x20] sm:$0xff]
    %v1679 = vld [vmem:[%s1673 + $0x28] sm:$0xff]
    %v1680 = vld [vmem:[%s1673 + $0x30] sm:$0xff]
    %v1681 = vld [vmem:[%s1673 + $0x38] sm:$0xff]
    %v1682 = vld [vmem:[%s1673 + $0x40] sm:$0xff]
    %v1683 = vld [vmem:[%s1673 + $0x48] sm:$0xff]
    %v1684 = vld [vmem:[%s1673 + $0x50] sm:$0xff]
    %v1685 = vld [vmem:[%s1673 + $0x58] sm:$0xff]
    %v1686 = vld [vmem:[%s1673 + $0x60] sm:$0xff]
    %v1687 = vld [vmem:[%s1673 + $0x68] sm:$0xff]
    %v1688 = vld [vmem:[%s1673 + $0x70] sm:$0xff]
    %v1689 = vld [vmem:[%s1673 + $0x78] sm:$0xff]
    %v1690 = vadd.f32 %v1657, %v1674
    %v1691 = vadd.f32 %v1658, %v1675
    %v1692 = vadd.f32 %v1659, %v1676
    %v1693 = vadd.f32 %v1660, %v1677
    %v1694 = vadd.f32 %v1661, %v1678
    %v1695 = vadd.f32 %v1662, %v1679
    %v1696 = vadd.f32 %v1663, %v1680
    %v1697 = vadd.f32 %v1664, %v1681
    %v1698 = vadd.f32 %v1665, %v1682
    %v1699 = vadd.f32 %v1666, %v1683
    %v1700 = vadd.f32 %v1667, %v1684
    %v1701 = vadd.f32 %v1668, %v1685
    %v1702 = vadd.f32 %v1669, %v1686
    %v1703 = vadd.f32 %v1670, %v1687
    %v1704 = vadd.f32 %v1671, %v1688
    %v1705 = vadd.f32 %v1672, %v1689
    %1706 = vmatprep.subr.mxu0 0.0
    %1707 = vmatpush1.msra.mxu0 %v1657
    %1708 = vmatprep.subr.mxu0 0.0
    %1709 = vmatpush1.msra.mxu0 %v1658
    %1710 = vmatprep.subr.mxu0 0.0
    %1711 = vmatpush1.msra.mxu0 %v1659
    %1712 = vmatprep.subr.mxu0 0.0
    %1713 = vmatpush1.msra.mxu0 %v1660
    %1714 = vmatprep.subr.mxu0 0.0
    %1715 = vmatpush1.msra.mxu0 %v1661
    %1716 = vmatprep.subr.mxu0 0.0
    %1717 = vmatpush1.msra.mxu0 %v1662
    %1718 = vmatprep.subr.mxu0 0.0
    %1719 = vmatpush1.msra.mxu0 %v1663
    %1720 = vmatprep.subr.mxu0 0.0
    %1721 = vmatpush1.msra.mxu0 %v1664
    %1722 = vmatprep.subr.mxu0 0.0
    %1723 = vmatpush1.msra.mxu0 %v1665
    %1724 = vmatprep.subr.mxu0 0.0
    %1725 = vmatpush1.msra.mxu0 %v1666
    %1726 = vmatprep.subr.mxu0 0.0
    %1727 = vmatpush1.msra.mxu0 %v1667
    %1728 = vmatprep.subr.mxu0 0.0
    %1729 = vmatpush1.msra.mxu0 %v1668
    %1730 = vmatprep.subr.mxu0 0.0
    %1731 = vmatpush1.msra.mxu0 %v1669
    %1732 = vmatprep.subr.mxu0 0.0
    %1733 = vmatpush1.msra.mxu0 %v1670
    %1734 = vmatprep.subr.mxu0 0.0
    %1735 = vmatpush1.msra.mxu0 %v1671
    %1736 = vmatprep.subr.mxu0 0.0
    %1737 = vmatpush1.msra.mxu0 %v1672
    %1738 = vmatprep.subr.mxu0 0.0
    %1739 = vmatpush1.msra.mxu0 0.0
    %1740 = vmatprep.subr.mxu0 0.0
    %1741 = vmatpush1.msra.mxu0 0.0
    %1742 = vmatprep.subr.mxu0 0.0
    %1743 = vmatpush1.msra.mxu0 0.0
    %1744 = vmatprep.subr.mxu0 0.0
    %1745 = vmatpush1.msra.mxu0 0.0
    %1746 = vmatprep.subr.mxu0 0.0
    %1747 = vmatpush1.msra.mxu0 0.0
    %1748 = vmatprep.subr.mxu0 0.0
    %1749 = vmatpush1.msra.mxu0 0.0
    %1750 = vmatprep.subr.mxu0 0.0
    %1751 = vmatpush1.msra.mxu0 0.0
    %1752 = vmatprep.subr.mxu0 0.0
    %1753 = vmatpush1.msra.mxu0 0.0
    %1754 = vmatprep.subr.mxu0 0.0
    %1755 = vmatpush1.msra.mxu0 0.0
    %1756 = vmatprep.subr.mxu0 0.0
    %1757 = vmatpush1.msra.mxu0 0.0
    %1758 = vmatprep.subr.mxu0 0.0
    %1759 = vmatpush1.msra.mxu0 0.0
    %1760 = vmatprep.subr.mxu0 0.0
    %1761 = vmatpush1.msra.mxu0 0.0
    %1762 = vmatprep.subr.mxu0 0.0
    %1763 = vmatpush1.msra.mxu0 0.0
    %1764 = vmatprep.subr.mxu0 0.0
    %1765 = vmatpush1.msra.mxu0 0.0
    %1766 = vmatprep.subr.mxu0 0.0
    %1767 = vmatpush1.msra.mxu0 0.0
    %1768 = vmatprep.subr.mxu0 0.0
    %1769 = vmatpush1.msra.mxu0 0.0
    %1770 = vmatprep.mubr.f32.mxu0 0.0
    %1771 = vmatmul.mubr.f32.gmra.mrb[0].mxu0 %v1653
    %v1772 = vpop.f32.mrb[0].mxu0
    %v1773 = vadd.f32 0.0, %v1772
    %v1774 = vpop.f32.mrb[0].mxu0
    %1775 = vdwg.mxu0
    %1776 = vmatprep.subr.mxu0 0.0
    %1777 = vmatpush1.msra.mxu0 %v1674
    %1778 = vmatprep.subr.mxu0 0.0
    %1779 = vmatpush1.msra.mxu0 %v1675
    %1780 = vmatprep.subr.mxu0 0.0
    %1781 = vmatpush1.msra.mxu0 %v1676
    %1782 = vmatprep.subr.mxu0 0.0
    %1783 = vmatpush1.msra.mxu0 %v1677
    %1784 = vmatprep.subr.mxu0 0.0
    %1785 = vmatpush1.msra.mxu0 %v1678
    %1786 = vmatprep.subr.mxu0 0.0
    %1787 = vmatpush1.msra.mxu0 %v1679
    %1788 = vmatprep.subr.mxu0 0.0
    %1789 = vmatpush1.msra.mxu0 %v1680
    %1790 = vmatprep.subr.mxu0 0.0
    %1791 = vmatpush1.msra.mxu0 %v1681
    %1792 = vmatprep.subr.mxu0 0.0
    %1793 = vmatpush1.msra.mxu0 %v1682
    %1794 = vmatprep.subr.mxu0 0.0
    %1795 = vmatpush1.msra.mxu0 %v1683
    %1796 = vmatprep.subr.mxu0 0.0
    %1797 = vmatpush1.msra.mxu0 %v1684
    %1798 = vmatprep.subr.mxu0 0.0
    %1799 = vmatpush1.msra.mxu0 %v1685
    %1800 = vmatprep.subr.mxu0 0.0
    %1801 = vmatpush1.msra.mxu0 %v1686
    %1802 = vmatprep.subr.mxu0 0.0
    %1803 = vmatpush1.msra.mxu0 %v1687
    %1804 = vmatprep.subr.mxu0 0.0
    %1805 = vmatpush1.msra.mxu0 %v1688
    %1806 = vmatprep.subr.mxu0 0.0
    %1807 = vmatpush1.msra.mxu0 %v1689
    %1808 = vmatprep.subr.mxu0 0.0
    %1809 = vmatpush1.msra.mxu0 0.0
    %1810 = vmatprep.subr.mxu0 0.0
    %1811 = vmatpush1.msra.mxu0 0.0
    %1812 = vmatprep.subr.mxu0 0.0
    %1813 = vmatpush1.msra.mxu0 0.0
    %1814 = vmatprep.subr.mxu0 0.0
    %1815 = vmatpush1.msra.mxu0 0.0
    %1816 = vmatprep.subr.mxu0 0.0
    %1817 = vmatpush1.msra.mxu0 0.0
    %1818 = vmatprep.subr.mxu0 0.0
    %1819 = vmatpush1.msra.mxu0 0.0
    %1820 = vmatprep.subr.mxu0 0.0
    %1821 = vmatpush1.msra.mxu0 0.0
    %1822 = vmatprep.subr.mxu0 0.0
    %1823 = vmatpush1.msra.mxu0 0.0
    %1824 = vmatprep.subr.mxu0 0.0
    %1825 = vmatpush1.msra.mxu0 0.0
    %1826 = vmatprep.subr.mxu0 0.0
    %1827 = vmatpush1.msra.mxu0 0.0
    %1828 = vmatprep.subr.mxu0 0.0
    %1829 = vmatpush1.msra.mxu0 0.0
    %1830 = vmatprep.subr.mxu0 0.0
    %1831 = vmatpush1.msra.mxu0 0.0
    %1832 = vmatprep.subr.mxu0 0.0
    %1833 = vmatpush1.msra.mxu0 0.0
    %1834 = vmatprep.subr.mxu0 0.0
    %1835 = vmatpush1.msra.mxu0 0.0
    %1836 = vmatprep.subr.mxu0 0.0
    %1837 = vmatpush1.msra.mxu0 0.0
    %1838 = vmatprep.subr.mxu0 0.0
    %1839 = vmatpush1.msra.mxu0 0.0
    %1840 = vmatprep.mubr.f32.mxu0 0.0
    %1841 = vmatmul.mubr.f32.gmra.mrb[0].mxu0 %v1655
    %v1842 = vpop.f32.mrb[0].mxu0
    %v1843 = vadd.f32 0.0, %v1842
    %v1844 = vpop.f32.mrb[0].mxu0
    %1845 = vdwg.mxu0
    %v1846 = vadd.f32 %v1653, %v1655
    %1847 = vmatprep.subr.mxu0 0.0
    %1848 = vmatpush1.msra.mxu0 %v1690
    %1849 = vmatprep.subr.mxu0 0.0
    %1850 = vmatpush1.msra.mxu0 %v1691
    %1851 = vmatprep.subr.mxu0 0.0
    %1852 = vmatpush1.msra.mxu0 %v1692
    %1853 = vmatprep.subr.mxu0 0.0
    %1854 = vmatpush1.msra.mxu0 %v1693
    %1855 = vmatprep.subr.mxu0 0.0
    %1856 = vmatpush1.msra.mxu0 %v1694
    %1857 = vmatprep.subr.mxu0 0.0
    %1858 = vmatpush1.msra.mxu0 %v1695
    %1859 = vmatprep.subr.mxu0 0.0
    %1860 = vmatpush1.msra.mxu0 %v1696
    %1861 = vmatprep.subr.mxu0 0.0
    %1862 = vmatpush1.msra.mxu0 %v1697
    %1863 = vmatprep.subr.mxu0 0.0
    %1864 = vmatpush1.msra.mxu0 %v1698
    %1865 = vmatprep.subr.mxu0 0.0
    %1866 = vmatpush1.msra.mxu0 %v1699
    %1867 = vmatprep.subr.mxu0 0.0
    %1868 = vmatpush1.msra.mxu0 %v1700
    %1869 = vmatprep.subr.mxu0 0.0
    %1870 = vmatpush1.msra.mxu0 %v1701
    %1871 = vmatprep.subr.mxu0 0.0
    %1872 = vmatpush1.msra.mxu0 %v1702
    %1873 = vmatprep.subr.mxu0 0.0
    %1874 = vmatpush1.msra.mxu0 %v1703
    %1875 = vmatprep.subr.mxu0 0.0
    %1876 = vmatpush1.msra.mxu0 %v1704
    %1877 = vmatprep.subr.mxu0 0.0
    %1878 = vmatpush1.msra.mxu0 %v1705
    %1879 = vmatprep.subr.mxu0 0.0
    %1880 = vmatpush1.msra.mxu0 0.0
    %1881 = vmatprep.subr.mxu0 0.0
    %1882 = vmatpush1.msra.mxu0 0.0
    %1883 = vmatprep.subr.mxu0 0.0
    %1884 = vmatpush1.msra.mxu0 0.0
    %1885 = vmatprep.subr.mxu0 0.0
    %1886 = vmatpush1.msra.mxu0 0.0
    %1887 = vmatprep.subr.mxu0 0.0
    %1888 = vmatpush1.msra.mxu0 0.0
    %1889 = vmatprep.subr.mxu0 0.0
    %1890 = vmatpush1.msra.mxu0 0.0
    %1891 = vmatprep.subr.mxu0 0.0
    %1892 = vmatpush1.msra.mxu0 0.0
    %1893 = vmatprep.subr.mxu0 0.0
    %1894 = vmatpush1.msra.mxu0 0.0
    %1895 = vmatprep.subr.mxu0 0.0
    %1896 = vmatpush1.msra.mxu0 0.0
    %1897 = vmatprep.subr.mxu0 0.0
    %1898 = vmatpush1.msra.mxu0 0.0
    %1899 = vmatprep.subr.mxu0 0.0
    %1900 = vmatpush1.msra.mxu0 0.0
    %1901 = vmatprep.subr.mxu0 0.0
    %1902 = vmatpush1.msra.mxu0 0.0
    %1903 = vmatprep.subr.mxu0 0.0
    %1904 = vmatpush1.msra.mxu0 0.0
    %1905 = vmatprep.subr.mxu0 0.0
    %1906 = vmatpush1.msra.mxu0 0.0
    %1907 = vmatprep.subr.mxu0 0.0
    %1908 = vmatpush1.msra.mxu0 0.0
    %1909 = vmatprep.subr.mxu0 0.0
    %1910 = vmatpush1.msra.mxu0 0.0
    %1911 = vmatprep.mubr.f32.mxu0 0.0
    %1912 = vmatmul.mubr.f32.gmra.mrb[0].mxu0 %v1846
    %v1913 = vpop.f32.mrb[0].mxu0
    %v1914 = vadd.f32 0.0, %v1913
    %v1915 = vpop.f32.mrb[0].mxu0
    %1916 = vdwg.mxu0
    %v1917 = vsub.f32 %v1773, %v1843
    %v1918 = vsub.f32 %v1914, %v1773
    %v1919 = vsub.f32 %v1918, %v1843
    %s1920 = scalar_lea.vmem [#allocation7], 896
    %v1921 = vld [vmem:[%s1920] sm:$0xff]
    %v1922 = vld [vmem:[%s1920 + $0x8] sm:$0xff]
    %v1923 = vld [vmem:[%s1920 + $0x10] sm:$0xff]
    %v1924 = vld [vmem:[%s1920 + $0x18] sm:$0xff]
    %v1925 = vld [vmem:[%s1920 + $0x20] sm:$0xff]
    %v1926 = vld [vmem:[%s1920 + $0x28] sm:$0xff]
    %v1927 = vld [vmem:[%s1920 + $0x30] sm:$0xff]
    %v1928 = vld [vmem:[%s1920 + $0x38] sm:$0xff]
    %v1929 = vld [vmem:[%s1920 + $0x40] sm:$0xff]
    %v1930 = vld [vmem:[%s1920 + $0x48] sm:$0xff]
    %v1931 = vld [vmem:[%s1920 + $0x50] sm:$0xff]
    %v1932 = vld [vmem:[%s1920 + $0x58] sm:$0xff]
    %v1933 = vld [vmem:[%s1920 + $0x60] sm:$0xff]
    %v1934 = vld [vmem:[%s1920 + $0x68] sm:$0xff]
    %v1935 = vld [vmem:[%s1920 + $0x70] sm:$0xff]
    %v1936 = vld [vmem:[%s1920 + $0x78] sm:$0xff]
    %s1937 = scalar_lea.vmem [#allocation8], 896
    %v1938 = vld [vmem:[%s1937] sm:$0xff]
    %v1939 = vld [vmem:[%s1937 + $0x8] sm:$0xff]
    %v1940 = vld [vmem:[%s1937 + $0x10] sm:$0xff]
    %v1941 = vld [vmem:[%s1937 + $0x18] sm:$0xff]
    %v1942 = vld [vmem:[%s1937 + $0x20] sm:$0xff]
    %v1943 = vld [vmem:[%s1937 + $0x28] sm:$0xff]
    %v1944 = vld [vmem:[%s1937 + $0x30] sm:$0xff]
    %v1945 = vld [vmem:[%s1937 + $0x38] sm:$0xff]
    %v1946 = vld [vmem:[%s1937 + $0x40] sm:$0xff]
    %v1947 = vld [vmem:[%s1937 + $0x48] sm:$0xff]
    %v1948 = vld [vmem:[%s1937 + $0x50] sm:$0xff]
    %v1949 = vld [vmem:[%s1937 + $0x58] sm:$0xff]
    %v1950 = vld [vmem:[%s1937 + $0x60] sm:$0xff]
    %v1951 = vld [vmem:[%s1937 + $0x68] sm:$0xff]
    %v1952 = vld [vmem:[%s1937 + $0x70] sm:$0xff]
    %v1953 = vld [vmem:[%s1937 + $0x78] sm:$0xff]
    %v1954 = vadd.f32 %v1921, %v1938
    %v1955 = vadd.f32 %v1922, %v1939
    %v1956 = vadd.f32 %v1923, %v1940
    %v1957 = vadd.f32 %v1924, %v1941
    %v1958 = vadd.f32 %v1925, %v1942
    %v1959 = vadd.f32 %v1926, %v1943
    %v1960 = vadd.f32 %v1927, %v1944
    %v1961 = vadd.f32 %v1928, %v1945
    %v1962 = vadd.f32 %v1929, %v1946
    %v1963 = vadd.f32 %v1930, %v1947
    %v1964 = vadd.f32 %v1931, %v1948
    %v1965 = vadd.f32 %v1932, %v1949
    %v1966 = vadd.f32 %v1933, %v1950
    %v1967 = vadd.f32 %v1934, %v1951
    %v1968 = vadd.f32 %v1935, %v1952
    %v1969 = vadd.f32 %v1936, %v1953
    %1970 = vmatprep.subr.mxu0 0.0
    %1971 = vmatpush1.msra.mxu0 %v1921
    %1972 = vmatprep.subr.mxu0 0.0
    %1973 = vmatpush1.msra.mxu0 %v1922
    %1974 = vmatprep.subr.mxu0 0.0
    %1975 = vmatpush1.msra.mxu0 %v1923
    %1976 = vmatprep.subr.mxu0 0.0
    %1977 = vmatpush1.msra.mxu0 %v1924
    %1978 = vmatprep.subr.mxu0 0.0
    %1979 = vmatpush1.msra.mxu0 %v1925
    %1980 = vmatprep.subr.mxu0 0.0
    %1981 = vmatpush1.msra.mxu0 %v1926
    %1982 = vmatprep.subr.mxu0 0.0
    %1983 = vmatpush1.msra.mxu0 %v1927
    %1984 = vmatprep.subr.mxu0 0.0
    %1985 = vmatpush1.msra.mxu0 %v1928
    %1986 = vmatprep.subr.mxu0 0.0
    %1987 = vmatpush1.msra.mxu0 %v1929
    %1988 = vmatprep.subr.mxu0 0.0
    %1989 = vmatpush1.msra.mxu0 %v1930
    %1990 = vmatprep.subr.mxu0 0.0
    %1991 = vmatpush1.msra.mxu0 %v1931
    %1992 = vmatprep.subr.mxu0 0.0
    %1993 = vmatpush1.msra.mxu0 %v1932
    %1994 = vmatprep.subr.mxu0 0.0
    %1995 = vmatpush1.msra.mxu0 %v1933
    %1996 = vmatprep.subr.mxu0 0.0
    %1997 = vmatpush1.msra.mxu0 %v1934
    %1998 = vmatprep.subr.mxu0 0.0
    %1999 = vmatpush1.msra.mxu0 %v1935
    %2000 = vmatprep.subr.mxu0 0.0
    %2001 = vmatpush1.msra.mxu0 %v1936
    %2002 = vmatprep.subr.mxu0 0.0
    %2003 = vmatpush1.msra.mxu0 0.0
    %2004 = vmatprep.subr.mxu0 0.0
    %2005 = vmatpush1.msra.mxu0 0.0
    %2006 = vmatprep.subr.mxu0 0.0
    %2007 = vmatpush1.msra.mxu0 0.0
    %2008 = vmatprep.subr.mxu0 0.0
    %2009 = vmatpush1.msra.mxu0 0.0
    %2010 = vmatprep.subr.mxu0 0.0
    %2011 = vmatpush1.msra.mxu0 0.0
    %2012 = vmatprep.subr.mxu0 0.0
    %2013 = vmatpush1.msra.mxu0 0.0
    %2014 = vmatprep.subr.mxu0 0.0
    %2015 = vmatpush1.msra.mxu0 0.0
    %2016 = vmatprep.subr.mxu0 0.0
    %2017 = vmatpush1.msra.mxu0 0.0
    %2018 = vmatprep.subr.mxu0 0.0
    %2019 = vmatpush1.msra.mxu0 0.0
    %2020 = vmatprep.subr.mxu0 0.0
    %2021 = vmatpush1.msra.mxu0 0.0
    %2022 = vmatprep.subr.mxu0 0.0
    %2023 = vmatpush1.msra.mxu0 0.0
    %2024 = vmatprep.subr.mxu0 0.0
    %2025 = vmatpush1.msra.mxu0 0.0
    %2026 = vmatprep.subr.mxu0 0.0
    %2027 = vmatpush1.msra.mxu0 0.0
    %2028 = vmatprep.subr.mxu0 0.0
    %2029 = vmatpush1.msra.mxu0 0.0
    %2030 = vmatprep.subr.mxu0 0.0
    %2031 = vmatpush1.msra.mxu0 0.0
    %2032 = vmatprep.subr.mxu0 0.0
    %2033 = vmatpush1.msra.mxu0 0.0
    %2034 = vmatprep.mubr.f32.mxu0 0.0
    %2035 = vmatmul.mubr.f32.gmra.mrb[0].mxu0 %v1917
    %v2036 = vpop.f32.mrb[0].mxu0
    %v2037 = vadd.f32 0.0, %v2036
    %v2038 = vpop.f32.mrb[0].mxu0
    %2039 = vdwg.mxu0
    %2040 = vmatprep.subr.mxu0 0.0
    %2041 = vmatpush1.msra.mxu0 %v1938
    %2042 = vmatprep.subr.mxu0 0.0
    %2043 = vmatpush1.msra.mxu0 %v1939
    %2044 = vmatprep.subr.mxu0 0.0
    %2045 = vmatpush1.msra.mxu0 %v1940
    %2046 = vmatprep.subr.mxu0 0.0
    %2047 = vmatpush1.msra.mxu0 %v1941
    %2048 = vmatprep.subr.mxu0 0.0
    %2049 = vmatpush1.msra.mxu0 %v1942
    %2050 = vmatprep.subr.mxu0 0.0
    %2051 = vmatpush1.msra.mxu0 %v1943
    %2052 = vmatprep.subr.mxu0 0.0
    %2053 = vmatpush1.msra.mxu0 %v1944
    %2054 = vmatprep.subr.mxu0 0.0
    %2055 = vmatpush1.msra.mxu0 %v1945
    %2056 = vmatprep.subr.mxu0 0.0
    %2057 = vmatpush1.msra.mxu0 %v1946
    %2058 = vmatprep.subr.mxu0 0.0
    %2059 = vmatpush1.msra.mxu0 %v1947
    %2060 = vmatprep.subr.mxu0 0.0
    %2061 = vmatpush1.msra.mxu0 %v1948
    %2062 = vmatprep.subr.mxu0 0.0
    %2063 = vmatpush1.msra.mxu0 %v1949
    %2064 = vmatprep.subr.mxu0 0.0
    %2065 = vmatpush1.msra.mxu0 %v1950
    %2066 = vmatprep.subr.mxu0 0.0
    %2067 = vmatpush1.msra.mxu0 %v1951
    %2068 = vmatprep.subr.mxu0 0.0
    %2069 = vmatpush1.msra.mxu0 %v1952
    %2070 = vmatprep.subr.mxu0 0.0
    %2071 = vmatpush1.msra.mxu0 %v1953
    %2072 = vmatprep.subr.mxu0 0.0
    %2073 = vmatpush1.msra.mxu0 0.0
    %2074 = vmatprep.subr.mxu0 0.0
    %2075 = vmatpush1.msra.mxu0 0.0
    %2076 = vmatprep.subr.mxu0 0.0
    %2077 = vmatpush1.msra.mxu0 0.0
    %2078 = vmatprep.subr.mxu0 0.0
    %2079 = vmatpush1.msra.mxu0 0.0
    %2080 = vmatprep.subr.mxu0 0.0
    %2081 = vmatpush1.msra.mxu0 0.0
    %2082 = vmatprep.subr.mxu0 0.0
    %2083 = vmatpush1.msra.mxu0 0.0
    %2084 = vmatprep.subr.mxu0 0.0
    %2085 = vmatpush1.msra.mxu0 0.0
    %2086 = vmatprep.subr.mxu0 0.0
    %2087 = vmatpush1.msra.mxu0 0.0
    %2088 = vmatprep.subr.mxu0 0.0
    %2089 = vmatpush1.msra.mxu0 0.0
    %2090 = vmatprep.subr.mxu0 0.0
    %2091 = vmatpush1.msra.mxu0 0.0
    %2092 = vmatprep.subr.mxu0 0.0
    %2093 = vmatpush1.msra.mxu0 0.0
    %2094 = vmatprep.subr.mxu0 0.0
    %2095 = vmatpush1.msra.mxu0 0.0
    %2096 = vmatprep.subr.mxu0 0.0
    %2097 = vmatpush1.msra.mxu0 0.0
    %2098 = vmatprep.subr.mxu0 0.0
    %2099 = vmatpush1.msra.mxu0 0.0
    %2100 = vmatprep.subr.mxu0 0.0
    %2101 = vmatpush1.msra.mxu0 0.0
    %2102 = vmatprep.subr.mxu0 0.0
    %2103 = vmatpush1.msra.mxu0 0.0
    %2104 = vmatprep.mubr.f32.mxu0 0.0
    %2105 = vmatmul.mubr.f32.gmra.mrb[0].mxu0 %v1919
    %v2106 = vpop.f32.mrb[0].mxu0
    %v2107 = vadd.f32 0.0, %v2106
    %v2108 = vpop.f32.mrb[0].mxu0
    %2109 = vdwg.mxu0
    %v2110 = vadd.f32 %v1917, %v1919
    %2111 = vmatprep.subr.mxu0 0.0
    %2112 = vmatpush1.msra.mxu0 %v1954
    %2113 = vmatprep.subr.mxu0 0.0
    %2114 = vmatpush1.msra.mxu0 %v1955
    %2115 = vmatprep.subr.mxu0 0.0
    %2116 = vmatpush1.msra.mxu0 %v1956
    %2117 = vmatprep.subr.mxu0 0.0
    %2118 = vmatpush1.msra.mxu0 %v1957
    %2119 = vmatprep.subr.mxu0 0.0
    %2120 = vmatpush1.msra.mxu0 %v1958
    %2121 = vmatprep.subr.mxu0 0.0
    %2122 = vmatpush1.msra.mxu0 %v1959
    %2123 = vmatprep.subr.mxu0 0.0
    %2124 = vmatpush1.msra.mxu0 %v1960
    %2125 = vmatprep.subr.mxu0 0.0
    %2126 = vmatpush1.msra.mxu0 %v1961
    %2127 = vmatprep.subr.mxu0 0.0
    %2128 = vmatpush1.msra.mxu0 %v1962
    %2129 = vmatprep.subr.mxu0 0.0
    %2130 = vmatpush1.msra.mxu0 %v1963
    %2131 = vmatprep.subr.mxu0 0.0
    %2132 = vmatpush1.msra.mxu0 %v1964
    %2133 = vmatprep.subr.mxu0 0.0
    %2134 = vmatpush1.msra.mxu0 %v1965
    %2135 = vmatprep.subr.mxu0 0.0
    %2136 = vmatpush1.msra.mxu0 %v1966
    %2137 = vmatprep.subr.mxu0 0.0
    %2138 = vmatpush1.msra.mxu0 %v1967
    %2139 = vmatprep.subr.mxu0 0.0
    %2140 = vmatpush1.msra.mxu0 %v1968
    %2141 = vmatprep.subr.mxu0 0.0
    %2142 = vmatpush1.msra.mxu0 %v1969
    %2143 = vmatprep.subr.mxu0 0.0
    %2144 = vmatpush1.msra.mxu0 0.0
    %2145 = vmatprep.subr.mxu0 0.0
    %2146 = vmatpush1.msra.mxu0 0.0
    %2147 = vmatprep.subr.mxu0 0.0
    %2148 = vmatpush1.msra.mxu0 0.0
    %2149 = vmatprep.subr.mxu0 0.0
    %2150 = vmatpush1.msra.mxu0 0.0
    %2151 = vmatprep.subr.mxu0 0.0
    %2152 = vmatpush1.msra.mxu0 0.0
    %2153 = vmatprep.subr.mxu0 0.0
    %2154 = vmatpush1.msra.mxu0 0.0
    %2155 = vmatprep.subr.mxu0 0.0
    %2156 = vmatpush1.msra.mxu0 0.0
    %2157 = vmatprep.subr.mxu0 0.0
    %2158 = vmatpush1.msra.mxu0 0.0
    %2159 = vmatprep.subr.mxu0 0.0
    %2160 = vmatpush1.msra.mxu0 0.0
    %2161 = vmatprep.subr.mxu0 0.0
    %2162 = vmatpush1.msra.mxu0 0.0
    %2163 = vmatprep.subr.mxu0 0.0
    %2164 = vmatpush1.msra.mxu0 0.0
    %2165 = vmatprep.subr.mxu0 0.0
    %2166 = vmatpush1.msra.mxu0 0.0
    %2167 = vmatprep.subr.mxu0 0.0
    %2168 = vmatpush1.msra.mxu0 0.0
    %2169 = vmatprep.subr.mxu0 0.0
    %2170 = vmatpush1.msra.mxu0 0.0
    %2171 = vmatprep.subr.mxu0 0.0
    %2172 = vmatpush1.msra.mxu0 0.0
    %2173 = vmatprep.subr.mxu0 0.0
    %2174 = vmatpush1.msra.mxu0 0.0
    %2175 = vmatprep.mubr.f32.mxu0 0.0
    %2176 = vmatmul.mubr.f32.gmra.mrb[0].mxu0 %v2110
    %v2177 = vpop.f32.mrb[0].mxu0
    %v2178 = vadd.f32 0.0, %v2177
    %v2179 = vpop.f32.mrb[0].mxu0
    %2180 = vdwg.mxu0
    %v2181 = vsub.f32 %v2037, %v2107
    %v2182 = vsub.f32 %v2178, %v2037
    %v2183 = vsub.f32 %v2182, %v2107
    %2184 = vst [vmem:[#allocation10] sm:$0xff] %v2181
    %2185 = vst [vmem:[#allocation11] sm:$0xff] %v2183
    // Predicated region
    $region34: #{tpu_custom_call.1} parent=1 // pred_check
      _
    $region35: #{tpu_custom_call.1} parent=1 // pred_check_branch
      %2187 = sbr.rel (0) target = $region37
    $region36: #{tpu_custom_call.1} parent=1 // pred_region
      %s2189 = ssub.s32 128, 128
      %2190 = vsyncadd [#allocation4], %s2189
      %s2192 = sshll.u32 [#allocation10], 4
      %s2193 = int_to_ptr.vmem [resolvable:$true] %s2192
      %2195 = dma.vmem_to_hbm [thread:$0]  %s2193, 128, %s4, [#allocation4]
    $region37: #{tpu_custom_call.1} parent=1 // pred_fallthru
      _
    // Predicated region
    $region38: #{tpu_custom_call.1} parent=1 // pred_check
      _
    $region39: #{tpu_custom_call.1} parent=1 // pred_check_branch
      %2197 = sbr.rel (0) target = $region41
    $region40: #{tpu_custom_call.1} parent=1 // pred_region
      %s2199 = ssub.s32 128, 128
      %2200 = vsyncadd [#allocation12], %s2199
      %s2202 = sshll.u32 [#allocation11], 4
      %s2203 = int_to_ptr.vmem [resolvable:$true] %s2202
      %2205 = dma.vmem_to_hbm [thread:$0]  %s2203, 128, %s5, [#allocation12]
    $region41: #{tpu_custom_call.1} parent=1 // pred_fallthru
      _
    // Predicated region
    $region42: #{tpu_custom_call.1} parent=1 // pred_check
      _
    $region43: #{tpu_custom_call.1} parent=1 // pred_check_branch
      %2207 = sbr.rel (0) target = $region45
    $region44: #{tpu_custom_call.1} parent=1 // pred_region
      %2208 = dma.done [#allocation4], 128
    $region45: #{tpu_custom_call.1} parent=1 // pred_fallthru
      _
    // Predicated region
    $region46: #{tpu_custom_call.1} parent=1 // pred_check
      _
    $region47: #{tpu_custom_call.1} parent=1 // pred_check_branch
      %2210 = sbr.rel (0) target = $region49
    $region48: #{tpu_custom_call.1} parent=1 // pred_region
      %2211 = dma.done [#allocation12], 128
    $region49: #{tpu_custom_call.1} parent=1 // pred_fallthru
      _
    %2212 = vsyncpa [#allocation3], 1
    %2213 = vsyncpa [#allocation6], 1
    %2214 = vsyncpa [#allocation9], 1
    %2215 = vsyncpa [#allocation4], 1
    %2216 = vsyncpa [#allocation12], 1

</llo_original>
